<compile_context>
chip_gen: v7x
topology: tpu7x:2x2x1
jax: 0.10.0
libtpu: 0.0.40
codegen_flags: <defaults>
</compile_context>

<pallas_src>
import jax
import jax.numpy as jnp
from jax.experimental import pallas as pl
from jax.experimental.pallas import tpu as pltpu

DATA_SIZE = 4
FEATURES = ('open', 'high', 'low', 'close')
IN_FEATURES = DATA_SIZE * len(FEATURES)      # 16
HIDDEN = 1024
OUT_FEATURES = 1
HIDDEN_CHUNK = 256                           # hidden-dim slice kept live in VMEM
N_CHUNKS = HIDDEN // HIDDEN_CHUNK
assert HIDDEN % HIDDEN_CHUNK == 0


def regression_kernel(x_ref, w1_ref, b1_ref, w2_ref, b2_ref, o_ref):
    tile_b = o_ref.shape[1]
    # (tile_b, 16) f32 -> (16, tile_b) bf16, done once; rides the XLU and hides
    # under the fc1 MXU work. bf16 operands cut f32-emulation passes ~3x and
    # keep f32 accumulation via preferred_element_type.
    xT = x_ref[...].T.astype(jnp.bfloat16)

    acc = jnp.zeros((1, tile_b), jnp.float32)
    # Statically unrolled chunk loop (4 iterations): chunk c+1's MXU pushes can
    # overlap chunk c's result pops / VPU work; only one (CHUNK, tile_b) h slice
    # is live at a time instead of the full (1024, tile_b) intermediate.
    for c in range(N_CHUNKS):
        lo, hi = c * HIDDEN_CHUNK, (c + 1) * HIDDEN_CHUNK
        w1c = w1_ref[lo:hi, :]                                        # (CHUNK, 16) bf16
        # fc1 chunk: bf16 x bf16 -> f32 accumulate on the MXU.
        h = jnp.dot(w1c, xT, preferred_element_type=jnp.float32)     # (CHUNK, tile_b) f32
        h = jnp.maximum(h + b1_ref[lo:hi, :], 0.0)                   # bias bcast + ReLU (f32 VPU)
        # fc2 chunk contribution (f32; only 1/16 of fc1's flops).
        acc = acc + jnp.dot(w2_ref[:, lo:hi], h,
                            preferred_element_type=jnp.float32)      # (1, tile_b) f32
    o_ref[...] = (acc + b2_ref[0, 0]).astype(o_ref.dtype)


def _max_tile_b():
    # 128 MiB VMEM (v5e/v6e): allow bigger tiles to amortize per-step overhead.
    # 64 MiB (v7x) or unknown: cap lower so the working set stays well in budget.
    try:
        vmem = pltpu.get_tpu_info().vmem_capacity_bytes
    except Exception:
        return 2048
    return 4096 if vmem >= (100 << 20) else 2048


def _choose_tile_b(B, max_tile, min_tile=256, step_overhead_cols=512):
    """Pick a lane-multiple batch tile minimizing padded columns plus the
    ~0.35us-per-grid-step overhead (expressed in equivalent columns), then make
    sure the 'parallel' batch axis has >= 2 steps when possible (v7x: 2 TCs)."""
    cands = []
    t = min_tile
    while t <= max_tile:
        cands.append(t)
        t *= 2

    def cost(t):
        steps = pl.cdiv(B, t)
        return steps * t + step_overhead_cols * steps

    tile = min(cands, key=lambda t: (cost(t), -t))
    while tile > min_tile and pl.cdiv(B, tile) < 2:
        tile //= 2
    return tile


def regression_forward(x, w1, b1, w2, b2, *, tile_b=None):
    """Forward pass of `Regression`.

    x : (B, 16) f32
    w1: (1024, 16)  fc1.weight (used in bf16 on the MXU)
    b1: (1024, 1)   fc1.bias as a column
    w2: (1, 1024)   fc2.weight
    b2: (1, 1)      fc2.bias
    returns (B, 1) f32
    """
    B = x.shape[0]
    if B == 0:                                   # degenerate-batch guard
        return jnp.zeros((0, OUT_FEATURES), jnp.float32)

    x = x.astype(jnp.float32)
    w1 = w1.astype(jnp.bfloat16)                 # fc1 MXU operand dtype
    b1 = b1.reshape(HIDDEN, 1).astype(jnp.float32)
    w2 = w2.reshape(OUT_FEATURES, HIDDEN).astype(jnp.float32)
    b2 = b2.reshape(1, 1).astype(jnp.float32)

    if tile_b is None:
        tile_b = _choose_tile_b(B, _max_tile_b())
    grid_steps = pl.cdiv(B, tile_b)
    Bp = grid_steps * tile_b
    if Bp != B:                                  # minimal zero-pad of the batch only
        x = jnp.pad(x, ((0, Bp - B), (0, 0)))

    # Right-sized VMEM budget (lane-padded blocks, double buffers, live h chunk).
    lane = 128
    vmem_needed = (
        2 * tile_b * lane * 4                    # x tile (16 -> 128 lane pad), 2 buffers
        + HIDDEN * lane * 2                      # w1 block (lane-padded bf16), resident
        + HIDDEN * lane * 4                      # b1 column (lane-padded), resident
        + 8 * HIDDEN * 4                         # w2 row, resident
        + 2 * HIDDEN_CHUNK * tile_b * 4          # live h chunk (+ scheduling slack)
        + 8 * tile_b * 4                         # accumulator
        + 2 * 8 * tile_b * 4                     # out tile, 2 buffers
    )
    vmem_limit = int(min(max(2 * vmem_needed, 8 << 20), 32 << 20))

    out = pl.pallas_call(
        regression_kernel,
        out_shape=jax.ShapeDtypeStruct((1, Bp), jnp.float32),
        grid=(grid_steps,),
        in_specs=[
            # x tile: streamed / double-buffered over the batch grid.
            pl.BlockSpec((tile_b, IN_FEATURES), lambda i: (i, 0)),
            # Weights & biases: constant block index -> VMEM-resident across steps.
            pl.BlockSpec((HIDDEN, IN_FEATURES), lambda i: (0, 0)),    # w1 (bf16)
            pl.BlockSpec((HIDDEN, 1), lambda i: (0, 0)),              # b1 column
            pl.BlockSpec((OUT_FEATURES, HIDDEN), lambda i: (0, 0)),   # w2 row
            # b2 as an SMEM scalar (no padded VMEM tile / extra DMA stream).
            pl.BlockSpec((1, 1), lambda i: (0, 0),
                         memory_space=pltpu.MemorySpace.SMEM),
        ],
        out_specs=pl.BlockSpec((1, tile_b), lambda i: (0, i)),
        compiler_params=pltpu.CompilerParams(
            dimension_semantics=("parallel",),   # megacore-shard the batch axis
            vmem_limit_bytes=vmem_limit,
        ),
        cost_estimate=pl.CostEstimate(
            flops=2 * Bp * IN_FEATURES * HIDDEN + 2 * Bp * HIDDEN,
            transcendentals=0,
            bytes_accessed=(4 * IN_FEATURES * Bp            # x
                            + 2 * HIDDEN * IN_FEATURES      # w1 (bf16)
                            + 4 * HIDDEN + 4 * HIDDEN + 4   # b1, w2, b2
                            + 4 * Bp),                      # out
        ),
    )(x, w1, b1, w2, b2)

    # Lane-dense (1, Bp) slab -> (B, 1) column expected by the module.
    return out[0, :B].reshape(B, OUT_FEATURES)


def init_params(key):
    """nn.Linear-style init U(-1/sqrt(fan_in), +1/sqrt(fan_in)).

    w1 is returned in bf16 (fc1 MXU operand, stored bf16 in HBM); b1/w2/b2 stay
    f32 so all post-matmul math matches the PyTorch module closely.
    """
    k1, k2, k3, k4 = jax.random.split(key, 4)
    bound1 = 1.0 / jnp.sqrt(jnp.float32(IN_FEATURES))
    bound2 = 1.0 / jnp.sqrt(jnp.float32(HIDDEN))
    w1 = jax.random.uniform(k1, (HIDDEN, IN_FEATURES), jnp.float32, -bound1, bound1)
    b1 = jax.random.uniform(k2, (HIDDEN, 1), jnp.float32, -bound1, bound1)
    w2 = jax.random.uniform(k3, (OUT_FEATURES, HIDDEN), jnp.float32, -bound2, bound2)
    b2 = jax.random.uniform(k4, (1, OUT_FEATURES), jnp.float32, -bound2, bound2)
    return w1.astype(jnp.bfloat16), b1, w2, b2


if __name__ == "__main__":
    key = jax.random.PRNGKey(0)
    kx, kp = jax.random.split(key)

    B = 8
    x = jax.random.normal(kx, (B, IN_FEATURES), jnp.float32)
    w1, b1, w2, b2 = init_params(kp)

    out = jax.block_until_ready(regression_forward(x, w1, b1, w2, b2))

    # Pure-JAX f32 reference using the same (bf16-stored) fc1 weights. The kernel
    # runs the fc1 matmul with bf16 operands + f32 accumulation, so compare at a
    # bf16-level tolerance (per review note).
    w1_f32 = w1.astype(jnp.float32)
    ref = jnp.maximum(x @ w1_f32.T + b1.T, 0.0) @ w2.T + b2
    assert out.shape == (B, OUT_FEATURES)
    assert jnp.allclose(out, ref, atol=2e-2, rtol=2e-2), float(jnp.max(jnp.abs(out - ref)))

    print("KERNEL_OK")
</pallas_src>

<mosaic_0001>
module attributes {stable_mosaic.version = 11 : i64} {
  func.func @regression_kernel(%arg0: i32, %arg1: memref<256x16xf32, #tpu.memory_space<vmem>>, %arg2: memref<1024x16xbf16, #tpu.memory_space<vmem>>, %arg3: memref<1024x1xf32, #tpu.memory_space<vmem>>, %arg4: memref<1x1024xf32, #tpu.memory_space<vmem>>, %arg5: memref<1x1xf32, #tpu.memory_space<smem>>, %arg6: memref<1x256xf32, #tpu.memory_space<vmem>>) attributes {dimension_semantics = [#tpu.dimension_semantics<parallel>], iteration_bounds = array<i64: 1>, scalar_prefetch = 0 : i64, scratch_operands = 0 : i64, tpu.core_type = #tpu.core_type<tc>, window_params = [{transform_indices = @transform_0, window_bounds = array<i64: 256, 16>}, {pipeline_mode = #tpu.pipeline_mode<synchronous>, transform_indices = @transform_1, window_bounds = array<i64: 1024, 16>}, {pipeline_mode = #tpu.pipeline_mode<synchronous>, transform_indices = @transform_2, window_bounds = array<i64: 1024, 1>}, {pipeline_mode = #tpu.pipeline_mode<synchronous>, transform_indices = @transform_3, window_bounds = array<i64: 1, 1024>}, {transform_indices = @transform_4, window_bounds = array<i64: 1, 1>}, {transform_indices = @transform_5, window_bounds = array<i64: 1, 256>}]} {
    %c0 = arith.constant 0 : index
    %c0_0 = arith.constant 0 : index
    %0 = vector.load %arg1[%c0, %c0_0] : memref<256x16xf32, #tpu.memory_space<vmem>>, vector<256x16xf32>
    %1 = tpu.transpose %0, [1, 0] : vector<256x16xf32> -> vector<16x256xf32>
    %2 = arith.truncf %1 : vector<16x256xf32> to vector<16x256xbf16>
    %cst = arith.constant 0.000000e+00 : f32
    %3 = vector.broadcast %cst : f32 to vector<1x256xf32>
    %c0_1 = arith.constant 0 : index
    %c0_2 = arith.constant 0 : index
    %4 = vector.load %arg2[%c0_1, %c0_2] : memref<1024x16xbf16, #tpu.memory_space<vmem>>, vector<256x16xbf16>
    %cst_3 = arith.constant dense<0.000000e+00> : vector<256x256xf32>
    %5 = tpu.matmul %4, %2, %cst_3 {dimension_numbers = #tpu.dot_dimension_numbers<[1], [0], [0], [1], [0, 0, 1, 1], [], []>} : vector<256x16xbf16>, vector<16x256xbf16>, vector<256x256xf32> -> vector<256x256xf32>
    %c0_4 = arith.constant 0 : index
    %c0_5 = arith.constant 0 : index
    %6 = vector.load %arg3[%c0_4, %c0_5] : memref<1024x1xf32, #tpu.memory_space<vmem>>, vector<256x1xf32>
    %7 = vector.broadcast %6 : vector<256x1xf32> to vector<256x256xf32>
    %8 = arith.addf %5, %7 : vector<256x256xf32>
    %cst_6 = arith.constant 0.000000e+00 : f32
    %9 = vector.broadcast %cst_6 : f32 to vector<256x256xf32>
    %10 = arith.maximumf %8, %9 : vector<256x256xf32>
    %c0_7 = arith.constant 0 : index
    %c0_8 = arith.constant 0 : index
    %11 = vector.load %arg4[%c0_7, %c0_8] : memref<1x1024xf32, #tpu.memory_space<vmem>>, vector<1x256xf32>
    %cst_9 = arith.constant dense<0.000000e+00> : vector<1x256xf32>
    %12 = tpu.matmul %11, %10, %cst_9 {dimension_numbers = #tpu.dot_dimension_numbers<[1], [0], [0], [1], [0, 0, 1, 1], [], []>} : vector<1x256xf32>, vector<256x256xf32>, vector<1x256xf32> -> vector<1x256xf32>
    %13 = arith.addf %3, %12 : vector<1x256xf32>
    %c256 = arith.constant 256 : index
    %c0_10 = arith.constant 0 : index
    %14 = vector.load %arg2[%c256, %c0_10] : memref<1024x16xbf16, #tpu.memory_space<vmem>>, vector<256x16xbf16>
    %cst_11 = arith.constant dense<0.000000e+00> : vector<256x256xf32>
    %15 = tpu.matmul %14, %2, %cst_11 {dimension_numbers = #tpu.dot_dimension_numbers<[1], [0], [0], [1], [0, 0, 1, 1], [], []>} : vector<256x16xbf16>, vector<16x256xbf16>, vector<256x256xf32> -> vector<256x256xf32>
    %c256_12 = arith.constant 256 : index
    %c0_13 = arith.constant 0 : index
    %16 = vector.load %arg3[%c256_12, %c0_13] : memref<1024x1xf32, #tpu.memory_space<vmem>>, vector<256x1xf32>
    %17 = vector.broadcast %16 : vector<256x1xf32> to vector<256x256xf32>
    %18 = arith.addf %15, %17 : vector<256x256xf32>
    %cst_14 = arith.constant 0.000000e+00 : f32
    %19 = vector.broadcast %cst_14 : f32 to vector<256x256xf32>
    %20 = arith.maximumf %18, %19 : vector<256x256xf32>
    %c0_15 = arith.constant 0 : index
    %c256_16 = arith.constant 256 : index
    %21 = vector.load %arg4[%c0_15, %c256_16] : memref<1x1024xf32, #tpu.memory_space<vmem>>, vector<1x256xf32>
    %cst_17 = arith.constant dense<0.000000e+00> : vector<1x256xf32>
    %22 = tpu.matmul %21, %20, %cst_17 {dimension_numbers = #tpu.dot_dimension_numbers<[1], [0], [0], [1], [0, 0, 1, 1], [], []>} : vector<1x256xf32>, vector<256x256xf32>, vector<1x256xf32> -> vector<1x256xf32>
    %23 = arith.addf %13, %22 : vector<1x256xf32>
    %c512 = arith.constant 512 : index
    %c0_18 = arith.constant 0 : index
    %24 = vector.load %arg2[%c512, %c0_18] : memref<1024x16xbf16, #tpu.memory_space<vmem>>, vector<256x16xbf16>
    %cst_19 = arith.constant dense<0.000000e+00> : vector<256x256xf32>
    %25 = tpu.matmul %24, %2, %cst_19 {dimension_numbers = #tpu.dot_dimension_numbers<[1], [0], [0], [1], [0, 0, 1, 1], [], []>} : vector<256x16xbf16>, vector<16x256xbf16>, vector<256x256xf32> -> vector<256x256xf32>
    %c512_20 = arith.constant 512 : index
    %c0_21 = arith.constant 0 : index
    %26 = vector.load %arg3[%c512_20, %c0_21] : memref<1024x1xf32, #tpu.memory_space<vmem>>, vector<256x1xf32>
    %27 = vector.broadcast %26 : vector<256x1xf32> to vector<256x256xf32>
    %28 = arith.addf %25, %27 : vector<256x256xf32>
    %cst_22 = arith.constant 0.000000e+00 : f32
    %29 = vector.broadcast %cst_22 : f32 to vector<256x256xf32>
    %30 = arith.maximumf %28, %29 : vector<256x256xf32>
    %c0_23 = arith.constant 0 : index
    %c512_24 = arith.constant 512 : index
    %31 = vector.load %arg4[%c0_23, %c512_24] : memref<1x1024xf32, #tpu.memory_space<vmem>>, vector<1x256xf32>
    %cst_25 = arith.constant dense<0.000000e+00> : vector<1x256xf32>
    %32 = tpu.matmul %31, %30, %cst_25 {dimension_numbers = #tpu.dot_dimension_numbers<[1], [0], [0], [1], [0, 0, 1, 1], [], []>} : vector<1x256xf32>, vector<256x256xf32>, vector<1x256xf32> -> vector<1x256xf32>
    %33 = arith.addf %23, %32 : vector<1x256xf32>
    %c768 = arith.constant 768 : index
    %c0_26 = arith.constant 0 : index
    %34 = vector.load %arg2[%c768, %c0_26] : memref<1024x16xbf16, #tpu.memory_space<vmem>>, vector<256x16xbf16>
    %cst_27 = arith.constant dense<0.000000e+00> : vector<256x256xf32>
    %35 = tpu.matmul %34, %2, %cst_27 {dimension_numbers = #tpu.dot_dimension_numbers<[1], [0], [0], [1], [0, 0, 1, 1], [], []>} : vector<256x16xbf16>, vector<16x256xbf16>, vector<256x256xf32> -> vector<256x256xf32>
    %c768_28 = arith.constant 768 : index
    %c0_29 = arith.constant 0 : index
    %36 = vector.load %arg3[%c768_28, %c0_29] : memref<1024x1xf32, #tpu.memory_space<vmem>>, vector<256x1xf32>
    %37 = vector.broadcast %36 : vector<256x1xf32> to vector<256x256xf32>
    %38 = arith.addf %35, %37 : vector<256x256xf32>
    %cst_30 = arith.constant 0.000000e+00 : f32
    %39 = vector.broadcast %cst_30 : f32 to vector<256x256xf32>
    %40 = arith.maximumf %38, %39 : vector<256x256xf32>
    %c0_31 = arith.constant 0 : index
    %c768_32 = arith.constant 768 : index
    %41 = vector.load %arg4[%c0_31, %c768_32] : memref<1x1024xf32, #tpu.memory_space<vmem>>, vector<1x256xf32>
    %cst_33 = arith.constant dense<0.000000e+00> : vector<1x256xf32>
    %42 = tpu.matmul %41, %40, %cst_33 {dimension_numbers = #tpu.dot_dimension_numbers<[1], [0], [0], [1], [0, 0, 1, 1], [], []>} : vector<1x256xf32>, vector<256x256xf32>, vector<1x256xf32> -> vector<1x256xf32>
    %43 = arith.addf %33, %42 : vector<1x256xf32>
    %c0_34 = arith.constant 0 : index
    %c0_35 = arith.constant 0 : index
    %44 = memref.load %arg5[%c0_34, %c0_35] : memref<1x1xf32, #tpu.memory_space<smem>>
    %45 = vector.broadcast %44 : f32 to vector<1x256xf32>
    %46 = arith.addf %43, %45 : vector<1x256xf32>
    %c0_36 = arith.constant 0 : index
    %c0_37 = arith.constant 0 : index
    %47 = vector.load %arg6[%c0_36, %c0_37] : memref<1x256xf32, #tpu.memory_space<vmem>>, vector<1x256xf32>
    tpu.vector_store %arg6[%c0_36, %c0_37], %46 {strides = array<i32>} : memref<1x256xf32, #tpu.memory_space<vmem>>, vector<1x256xf32>,
    return
  }
  func.func @transform_0(%arg0: i32) -> (i32, i32) {
    %c0_i32 = arith.constant 0 : i32
    %c0_i32_0 = arith.constant 0 : i32
    return %arg0, %c0_i32 : i32, i32
  }
  func.func @transform_1(%arg0: i32) -> (i32, i32) {
    %c0_i32 = arith.constant 0 : i32
    %c0_i32_0 = arith.constant 0 : i32
    %c0_i32_1 = arith.constant 0 : i32
    return %c0_i32, %c0_i32_0 : i32, i32
  }
  func.func @transform_2(%arg0: i32) -> (i32, i32) {
    %c0_i32 = arith.constant 0 : i32
    %c0_i32_0 = arith.constant 0 : i32
    %c0_i32_1 = arith.constant 0 : i32
    return %c0_i32, %c0_i32_0 : i32, i32
  }
  func.func @transform_3(%arg0: i32) -> (i32, i32) {
    %c0_i32 = arith.constant 0 : i32
    %c0_i32_0 = arith.constant 0 : i32
    %c0_i32_1 = arith.constant 0 : i32
    return %c0_i32, %c0_i32_0 : i32, i32
  }
  func.func @transform_4(%arg0: i32) -> (i32, i32) {
    %c0_i32 = arith.constant 0 : i32
    %c0_i32_0 = arith.constant 0 : i32
    %c0_i32_1 = arith.constant 0 : i32
    return %c0_i32, %c0_i32_0 : i32, i32
  }
  func.func @transform_5(%arg0: i32) -> (i32, i32) {
    %c0_i32 = arith.constant 0 : i32
    %c0_i32_0 = arith.constant 0 : i32
    return %c0_i32, %arg0 : i32, i32
  }
}

</mosaic_0001>

<llo_original>
// kernel: tpu_custom_call.1
$region0: #{tpu_custom_call.1}
  #allocation0 [shape = 'u32[]', space=smem, size = 0x4, offset = 0x4, fixed_abs, tag = 'smem constant byte address 0x4 - core index']
  #allocation1 [shape = 'u32[144,128]{1,0:T(1,128)}', space=vmem, size = 0x12000, scoped, tag = 'internal scratch']
  #allocation2 [shape = 'f32[1,1]{1,0:T(1,128)S(6)}', space=smem, size = 0x200, scoped, tag = 'scoped memory for tpu_custom_call.1']
  %s0 = inlined_call_operand.vmem [shape: f32[256,16], index: 0, kind: input, shape index: {}]
  %s1 = inlined_call_operand.vmem [shape: bf16[1024,16], index: 1, kind: input, shape index: {}]
  %s2 = inlined_call_operand.vmem [shape: f32[1024,1], index: 2, kind: input, shape index: {}]
  %s3 = inlined_call_operand.vmem [shape: f32[1,1024], index: 3, kind: input, shape index: {}]
  %s4 = inlined_call_operand.<no memory space> [shape: f32[1,1], index: 4, kind: input, shape index: {}]
  %s5 = inlined_call_operand.hbm [shape: f32[1,256], index: 5, kind: output, shape index: {}]
  %s6 = sld [smem:[#allocation0]]
  $region30: #{tpu_custom_call.1} parent=0
    _
  %s8 = ssub.s32 1, %s6
  %s9 = scalar_select 0, %s8, %s6
  %10 = sst [smem:[#allocation2]] %s4
  $region1: #{tpu_custom_call.1} parent=0
    #allocation3 [shape = 'u8[1024]{0}', space=vmem, size = 0x400, scoped, tag = 'output window, operand 0, single buffered']
    #allocation4 [shape = 's32[1]{0}', space=sflag, size = 0x4, scoped, tag = 'scoped memory for tpu_custom_call.1']
    %11 = vsyncpa [#allocation4], 0
    // Predicated region
    $region2: #{tpu_custom_call.1} parent=1 // pred_check
      _
    $region3: #{tpu_custom_call.1} parent=1 // pred_check_branch
      %13 = sbr.rel (0) target = $region5
    $region4: #{tpu_custom_call.1} parent=1 // pred_region
      _
    $region5: #{tpu_custom_call.1} parent=1 // pred_fallthru
      _
    // Predicated region
    $region6: #{tpu_custom_call.1} parent=1 // pred_check
      _
    $region7: #{tpu_custom_call.1} parent=1 // pred_check_branch
      %15 = sbr.rel (0) target = $region9
    $region8: #{tpu_custom_call.1} parent=1 // pred_region
      _
    $region9: #{tpu_custom_call.1} parent=1 // pred_fallthru
      _
    // Predicated region
    $region10: #{tpu_custom_call.1} parent=1 // pred_check
      _
    $region11: #{tpu_custom_call.1} parent=1 // pred_check_branch
      %17 = sbr.rel (0) target = $region13
    $region12: #{tpu_custom_call.1} parent=1 // pred_region
      _
    $region13: #{tpu_custom_call.1} parent=1 // pred_fallthru
      _
    // Predicated region
    $region14: #{tpu_custom_call.1} parent=1 // pred_check
      _
    $region15: #{tpu_custom_call.1} parent=1 // pred_check_branch
      %19 = sbr.rel (0) target = $region17
    $region16: #{tpu_custom_call.1} parent=1 // pred_region
      _
    $region17: #{tpu_custom_call.1} parent=1 // pred_fallthru
      _
    // Predicated region
    $region18: #{tpu_custom_call.1} parent=1 // pred_check
      _
    $region19: #{tpu_custom_call.1} parent=1 // pred_check_branch
      %21 = sbr.rel (0) target = $region21
    $region20: #{tpu_custom_call.1} parent=1 // pred_region
      _
    $region21: #{tpu_custom_call.1} parent=1 // pred_fallthru
      _
    %v23 = vld [vmem:[%s0] sm:$0xff]
    %v24 = vld [vmem:[%s0 + $0x8] sm:$0xff]
    %v25 = vld [vmem:[%s0 + $0x10] sm:$0xff]
    %v26 = vld [vmem:[%s0 + $0x18] sm:$0xff]
    %v27 = vld [vmem:[%s0 + $0x20] sm:$0xff]
    %v28 = vld [vmem:[%s0 + $0x28] sm:$0xff]
    %v29 = vld [vmem:[%s0 + $0x30] sm:$0xff]
    %v30 = vld [vmem:[%s0 + $0x38] sm:$0xff]
    %v31 = vld [vmem:[%s0 + $0x40] sm:$0xff]
    %v32 = vld [vmem:[%s0 + $0x48] sm:$0xff]
    %v33 = vld [vmem:[%s0 + $0x50] sm:$0xff]
    %v34 = vld [vmem:[%s0 + $0x58] sm:$0xff]
    %v35 = vld [vmem:[%s0 + $0x60] sm:$0xff]
    %v36 = vld [vmem:[%s0 + $0x68] sm:$0xff]
    %v37 = vld [vmem:[%s0 + $0x70] sm:$0xff]
    %v38 = vld [vmem:[%s0 + $0x78] sm:$0xff]
    %v39 = vld [vmem:[%s0 + $0x80] sm:$0xff]
    %v40 = vld [vmem:[%s0 + $0x88] sm:$0xff]
    %v41 = vld [vmem:[%s0 + $0x90] sm:$0xff]
    %v42 = vld [vmem:[%s0 + $0x98] sm:$0xff]
    %v43 = vld [vmem:[%s0 + $0xa0] sm:$0xff]
    %v44 = vld [vmem:[%s0 + $0xa8] sm:$0xff]
    %v45 = vld [vmem:[%s0 + $0xb0] sm:$0xff]
    %v46 = vld [vmem:[%s0 + $0xb8] sm:$0xff]
    %v47 = vld [vmem:[%s0 + $0xc0] sm:$0xff]
    %v48 = vld [vmem:[%s0 + $0xc8] sm:$0xff]
    %v49 = vld [vmem:[%s0 + $0xd0] sm:$0xff]
    %v50 = vld [vmem:[%s0 + $0xd8] sm:$0xff]
    %v51 = vld [vmem:[%s0 + $0xe0] sm:$0xff]
    %v52 = vld [vmem:[%s0 + $0xe8] sm:$0xff]
    %v53 = vld [vmem:[%s0 + $0xf0] sm:$0xff]
    %v54 = vld [vmem:[%s0 + $0xf8] sm:$0xff]
    %55 = vxpose.xlu0.b32.start [1/16] %v23, 128
    %56 = vxpose.xlu0.b32.cont [2/16] %v24, 128
    %57 = vxpose.xlu0.b32.cont [3/16] %v25, 128
    %58 = vxpose.xlu0.b32.cont [4/16] %v26, 128
    %59 = vxpose.xlu0.b32.cont [5/16] %v27, 128
    %60 = vxpose.xlu0.b32.cont [6/16] %v28, 128
    %61 = vxpose.xlu0.b32.cont [7/16] %v29, 128
    %62 = vxpose.xlu0.b32.cont [8/16] %v30, 128
    %63 = vxpose.xlu0.b32.cont [9/16] %v31, 128
    %64 = vxpose.xlu0.b32.cont [10/16] %v32, 128
    %65 = vxpose.xlu0.b32.cont [11/16] %v33, 128
    %66 = vxpose.xlu0.b32.cont [12/16] %v34, 128
    %67 = vxpose.xlu0.b32.cont [13/16] %v35, 128
    %68 = vxpose.xlu0.b32.cont [14/16] %v36, 128
    %69 = vxpose.xlu0.b32.cont [15/16] %v37, 128
    %70 = vxpose.xlu0.b32.end [16/16] %v38, 128
    %v71 = vpop.trf.xlu0
    %v72 = vpop.trf.xlu0
    %v73 = vpop.trf.xlu0
    %v74 = vpop.trf.xlu0
    %v75 = vpop.trf.xlu0
    %v76 = vpop.trf.xlu0
    %v77 = vpop.trf.xlu0
    %v78 = vpop.trf.xlu0
    %v79 = vpop.trf.xlu0
    %v80 = vpop.trf.xlu0
    %v81 = vpop.trf.xlu0
    %v82 = vpop.trf.xlu0
    %v83 = vpop.trf.xlu0
    %v84 = vpop.trf.xlu0
    %v85 = vpop.trf.xlu0
    %v86 = vpop.trf.xlu0
    %87 = vxpose.xlu0.b32.start [1/16] %v39, 128
    %88 = vxpose.xlu0.b32.cont [2/16] %v40, 128
    %89 = vxpose.xlu0.b32.cont [3/16] %v41, 128
    %90 = vxpose.xlu0.b32.cont [4/16] %v42, 128
    %91 = vxpose.xlu0.b32.cont [5/16] %v43, 128
    %92 = vxpose.xlu0.b32.cont [6/16] %v44, 128
    %93 = vxpose.xlu0.b32.cont [7/16] %v45, 128
    %94 = vxpose.xlu0.b32.cont [8/16] %v46, 128
    %95 = vxpose.xlu0.b32.cont [9/16] %v47, 128
    %96 = vxpose.xlu0.b32.cont [10/16] %v48, 128
    %97 = vxpose.xlu0.b32.cont [11/16] %v49, 128
    %98 = vxpose.xlu0.b32.cont [12/16] %v50, 128
    %99 = vxpose.xlu0.b32.cont [13/16] %v51, 128
    %100 = vxpose.xlu0.b32.cont [14/16] %v52, 128
    %101 = vxpose.xlu0.b32.cont [15/16] %v53, 128
    %102 = vxpose.xlu0.b32.end [16/16] %v54, 128
    %v103 = vpop.trf.xlu0
    %v104 = vpop.trf.xlu0
    %v105 = vpop.trf.xlu0
    %v106 = vpop.trf.xlu0
    %v107 = vpop.trf.xlu0
    %v108 = vpop.trf.xlu0
    %v109 = vpop.trf.xlu0
    %v110 = vpop.trf.xlu0
    %v111 = vpop.trf.xlu0
    %v112 = vpop.trf.xlu0
    %v113 = vpop.trf.xlu0
    %v114 = vpop.trf.xlu0
    %v115 = vpop.trf.xlu0
    %v116 = vpop.trf.xlu0
    %v117 = vpop.trf.xlu0
    %v118 = vpop.trf.xlu0
    %v119 = vpack.c.bf16 %v72, %v71
    %v120 = vpack.c.bf16 %v104, %v103
    %v121 = vld [vmem:[%s1] sm:$0xf]
    %v122 = vld [vmem:[%s1 + $0x4] sm:$0xf]
    %v123 = vld [vmem:[%s1 + $0x8] sm:$0xf]
    %v124 = vld [vmem:[%s1 + $0xc] sm:$0xf]
    %v125 = vld [vmem:[%s1 + $0x10] sm:$0xf]
    %v126 = vld [vmem:[%s1 + $0x14] sm:$0xf]
    %v127 = vld [vmem:[%s1 + $0x18] sm:$0xf]
    %v128 = vld [vmem:[%s1 + $0x1c] sm:$0xf]
    %v129 = vld [vmem:[%s1 + $0x20] sm:$0xf]
    %v130 = vld [vmem:[%s1 + $0x24] sm:$0xf]
    %v131 = vld [vmem:[%s1 + $0x28] sm:$0xf]
    %v132 = vld [vmem:[%s1 + $0x2c] sm:$0xf]
    %v133 = vld [vmem:[%s1 + $0x30] sm:$0xf]
    %v134 = vld [vmem:[%s1 + $0x34] sm:$0xf]
    %v135 = vld [vmem:[%s1 + $0x38] sm:$0xf]
    %v136 = vld [vmem:[%s1 + $0x3c] sm:$0xf]
    %v137 = vld [vmem:[%s1 + $0x40] sm:$0xf]
    %v138 = vld [vmem:[%s1 + $0x44] sm:$0xf]
    %v139 = vld [vmem:[%s1 + $0x48] sm:$0xf]
    %v140 = vld [vmem:[%s1 + $0x4c] sm:$0xf]
    %v141 = vld [vmem:[%s1 + $0x50] sm:$0xf]
    %v142 = vld [vmem:[%s1 + $0x54] sm:$0xf]
    %v143 = vld [vmem:[%s1 + $0x58] sm:$0xf]
    %v144 = vld [vmem:[%s1 + $0x5c] sm:$0xf]
    %v145 = vld [vmem:[%s1 + $0x60] sm:$0xf]
    %v146 = vld [vmem:[%s1 + $0x64] sm:$0xf]
    %v147 = vld [vmem:[%s1 + $0x68] sm:$0xf]
    %v148 = vld [vmem:[%s1 + $0x6c] sm:$0xf]
    %v149 = vld [vmem:[%s1 + $0x70] sm:$0xf]
    %v150 = vld [vmem:[%s1 + $0x74] sm:$0xf]
    %v151 = vld [vmem:[%s1 + $0x78] sm:$0xf]
    %v152 = vld [vmem:[%s1 + $0x7c] sm:$0xf]
    %v153 = vld [vmem:[%s2] sm:$0xff]
    %v154 = vld [vmem:[%s2 + $0x8] sm:$0xff]
    %v155 = vld [vmem:[%s2 + $0x10] sm:$0xff]
    %v156 = vld [vmem:[%s2 + $0x18] sm:$0xff]
    %v157 = vld [vmem:[%s2 + $0x20] sm:$0xff]
    %v158 = vld [vmem:[%s2 + $0x28] sm:$0xff]
    %v159 = vld [vmem:[%s2 + $0x30] sm:$0xff]
    %v160 = vld [vmem:[%s2 + $0x38] sm:$0xff]
    %v161 = vld [vmem:[%s2 + $0x40] sm:$0xff]
    %v162 = vld [vmem:[%s2 + $0x48] sm:$0xff]
    %v163 = vld [vmem:[%s2 + $0x50] sm:$0xff]
    %v164 = vld [vmem:[%s2 + $0x58] sm:$0xff]
    %v165 = vld [vmem:[%s2 + $0x60] sm:$0xff]
    %v166 = vld [vmem:[%s2 + $0x68] sm:$0xff]
    %v167 = vld [vmem:[%s2 + $0x70] sm:$0xff]
    %v168 = vld [vmem:[%s2 + $0x78] sm:$0xff]
    %v169 = vld [vmem:[%s2 + $0x80] sm:$0xff]
    %v170 = vld [vmem:[%s2 + $0x88] sm:$0xff]
    %v171 = vld [vmem:[%s2 + $0x90] sm:$0xff]
    %v172 = vld [vmem:[%s2 + $0x98] sm:$0xff]
    %v173 = vld [vmem:[%s2 + $0xa0] sm:$0xff]
    %v174 = vld [vmem:[%s2 + $0xa8] sm:$0xff]
    %v175 = vld [vmem:[%s2 + $0xb0] sm:$0xff]
    %v176 = vld [vmem:[%s2 + $0xb8] sm:$0xff]
    %v177 = vld [vmem:[%s2 + $0xc0] sm:$0xff]
    %v178 = vld [vmem:[%s2 + $0xc8] sm:$0xff]
    %v179 = vld [vmem:[%s2 + $0xd0] sm:$0xff]
    %v180 = vld [vmem:[%s2 + $0xd8] sm:$0xff]
    %v181 = vld [vmem:[%s2 + $0xe0] sm:$0xff]
    %v182 = vld [vmem:[%s2 + $0xe8] sm:$0xff]
    %v183 = vld [vmem:[%s2 + $0xf0] sm:$0xff]
    %v184 = vld [vmem:[%s2 + $0xf8] sm:$0xff]
    %186 = vset.pattern.permute.xlu0 0
    %187 = vperm.xlu0 %186, %v153
    %v188 = vpop.permute.xlu0 %187
    %191 = vset.pattern.permute.xlu0 0
    %192 = vperm.xlu0 %191, %v154
    %v193 = vpop.permute.xlu0 %192
    %196 = vset.pattern.permute.xlu0 0
    %197 = vperm.xlu0 %196, %v155
    %v198 = vpop.permute.xlu0 %197
    %201 = vset.pattern.permute.xlu0 0
    %202 = vperm.xlu0 %201, %v156
    %v203 = vpop.permute.xlu0 %202
    %206 = vset.pattern.permute.xlu0 0
    %207 = vperm.xlu0 %206, %v157
    %v208 = vpop.permute.xlu0 %207
    %211 = vset.pattern.permute.xlu0 0
    %212 = vperm.xlu0 %211, %v158
    %v213 = vpop.permute.xlu0 %212
    %216 = vset.pattern.permute.xlu0 0
    %217 = vperm.xlu0 %216, %v159
    %v218 = vpop.permute.xlu0 %217
    %221 = vset.pattern.permute.xlu0 0
    %222 = vperm.xlu0 %221, %v160
    %v223 = vpop.permute.xlu0 %222
    %226 = vset.pattern.permute.xlu0 0
    %227 = vperm.xlu0 %226, %v161
    %v228 = vpop.permute.xlu0 %227
    %231 = vset.pattern.permute.xlu0 0
    %232 = vperm.xlu0 %231, %v162
    %v233 = vpop.permute.xlu0 %232
    %236 = vset.pattern.permute.xlu0 0
    %237 = vperm.xlu0 %236, %v163
    %v238 = vpop.permute.xlu0 %237
    %241 = vset.pattern.permute.xlu0 0
    %242 = vperm.xlu0 %241, %v164
    %v243 = vpop.permute.xlu0 %242
    %246 = vset.pattern.permute.xlu0 0
    %247 = vperm.xlu0 %246, %v165
    %v248 = vpop.permute.xlu0 %247
    %251 = vset.pattern.permute.xlu0 0
    %252 = vperm.xlu0 %251, %v166
    %v253 = vpop.permute.xlu0 %252
    %256 = vset.pattern.permute.xlu0 0
    %257 = vperm.xlu0 %256, %v167
    %v258 = vpop.permute.xlu0 %257
    %261 = vset.pattern.permute.xlu0 0
    %262 = vperm.xlu0 %261, %v168
    %v263 = vpop.permute.xlu0 %262
    %266 = vset.pattern.permute.xlu0 0
    %267 = vperm.xlu0 %266, %v169
    %v268 = vpop.permute.xlu0 %267
    %271 = vset.pattern.permute.xlu0 0
    %272 = vperm.xlu0 %271, %v170
    %v273 = vpop.permute.xlu0 %272
    %276 = vset.pattern.permute.xlu0 0
    %277 = vperm.xlu0 %276, %v171
    %v278 = vpop.permute.xlu0 %277
    %281 = vset.pattern.permute.xlu0 0
    %282 = vperm.xlu0 %281, %v172
    %v283 = vpop.permute.xlu0 %282
    %286 = vset.pattern.permute.xlu0 0
    %287 = vperm.xlu0 %286, %v173
    %v288 = vpop.permute.xlu0 %287
    %291 = vset.pattern.permute.xlu0 0
    %292 = vperm.xlu0 %291, %v174
    %v293 = vpop.permute.xlu0 %292
    %296 = vset.pattern.permute.xlu0 0
    %297 = vperm.xlu0 %296, %v175
    %v298 = vpop.permute.xlu0 %297
    %301 = vset.pattern.permute.xlu0 0
    %302 = vperm.xlu0 %301, %v176
    %v303 = vpop.permute.xlu0 %302
    %306 = vset.pattern.permute.xlu0 0
    %307 = vperm.xlu0 %306, %v177
    %v308 = vpop.permute.xlu0 %307
    %311 = vset.pattern.permute.xlu0 0
    %312 = vperm.xlu0 %311, %v178
    %v313 = vpop.permute.xlu0 %312
    %316 = vset.pattern.permute.xlu0 0
    %317 = vperm.xlu0 %316, %v179
    %v318 = vpop.permute.xlu0 %317
    %321 = vset.pattern.permute.xlu0 0
    %322 = vperm.xlu0 %321, %v180
    %v323 = vpop.permute.xlu0 %322
    %326 = vset.pattern.permute.xlu0 0
    %327 = vperm.xlu0 %326, %v181
    %v328 = vpop.permute.xlu0 %327
    %331 = vset.pattern.permute.xlu0 0
    %332 = vperm.xlu0 %331, %v182
    %v333 = vpop.permute.xlu0 %332
    %336 = vset.pattern.permute.xlu0 0
    %337 = vperm.xlu0 %336, %v183
    %v338 = vpop.permute.xlu0 %337
    %341 = vset.pattern.permute.xlu0 0
    %342 = vperm.xlu0 %341, %v184
    %v343 = vpop.permute.xlu0 %342
    %v377 = vunpack.c.l.b16 %v121
    %v378 = vunpack.c.l.b16 %v122
    %v379 = vunpack.c.l.b16 %v123
    %v380 = vunpack.c.l.b16 %v124
    %v381 = vunpack.c.l.b16 %v125
    %v382 = vunpack.c.l.b16 %v126
    %v383 = vunpack.c.l.b16 %v127
    %v384 = vunpack.c.l.b16 %v128
    %v385 = vunpack.c.l.b16 %v129
    %v386 = vunpack.c.l.b16 %v130
    %v387 = vunpack.c.l.b16 %v131
    %v388 = vunpack.c.l.b16 %v132
    %v389 = vunpack.c.l.b16 %v133
    %v390 = vunpack.c.l.b16 %v134
    %v391 = vunpack.c.l.b16 %v135
    %v392 = vunpack.c.l.b16 %v136
    %v393 = vunpack.c.l.b16 %v137
    %v394 = vunpack.c.l.b16 %v138
    %v395 = vunpack.c.l.b16 %v139
    %v396 = vunpack.c.l.b16 %v140
    %v397 = vunpack.c.l.b16 %v141
    %v398 = vunpack.c.l.b16 %v142
    %v399 = vunpack.c.l.b16 %v143
    %v400 = vunpack.c.l.b16 %v144
    %v401 = vunpack.c.l.b16 %v145
    %v402 = vunpack.c.l.b16 %v146
    %v403 = vunpack.c.l.b16 %v147
    %v404 = vunpack.c.l.b16 %v148
    %v405 = vunpack.c.l.b16 %v149
    %v406 = vunpack.c.l.b16 %v150
    %v407 = vunpack.c.l.b16 %v151
    %v408 = vunpack.c.l.b16 %v152
    %v409 = vpack.c.b16 %v378, %v377
    %v410 = vpack.c.b16 %v380, %v379
    %v411 = vpack.c.b16 %v382, %v381
    %v412 = vpack.c.b16 %v384, %v383
    %v413 = vpack.c.b16 %v386, %v385
    %v414 = vpack.c.b16 %v388, %v387
    %v415 = vpack.c.b16 %v390, %v389
    %v416 = vpack.c.b16 %v392, %v391
    %v417 = vpack.c.b16 %v394, %v393
    %v418 = vpack.c.b16 %v396, %v395
    %v419 = vpack.c.b16 %v398, %v397
    %v420 = vpack.c.b16 %v400, %v399
    %v421 = vpack.c.b16 %v402, %v401
    %v422 = vpack.c.b16 %v404, %v403
    %v423 = vpack.c.b16 %v406, %v405
    %v424 = vpack.c.b16 %v408, %v407
    %vm425 = vcmask 130048
    %v427 = vsel %vm425, %v409, 0
    %v430 = vsel %vm425, %v410, 0
    %v433 = vsel %vm425, %v411, 0
    %v436 = vsel %vm425, %v412, 0
    %v439 = vsel %vm425, %v413, 0
    %v442 = vsel %vm425, %v414, 0
    %v445 = vsel %vm425, %v415, 0
    %v448 = vsel %vm425, %v416, 0
    %v451 = vsel %vm425, %v417, 0
    %v454 = vsel %vm425, %v418, 0
    %v457 = vsel %vm425, %v419, 0
    %v460 = vsel %vm425, %v420, 0
    %v463 = vsel %vm425, %v421, 0
    %v466 = vsel %vm425, %v422, 0
    %v469 = vsel %vm425, %v423, 0
    %v472 = vsel %vm425, %v424, 0
    %474 = vmatprep.subr.bf16.mxu0 %v120
    %475 = vmatpush1.bf16.msra.mxu0 %v119
    %476 = vmatprep.subr.bf16.mxu0 0
    %477 = vmatpush1.bf16.msra.mxu0 0
    %478 = vmatprep.subr.bf16.mxu0 0
    %479 = vmatpush1.bf16.msra.mxu0 0
    %480 = vmatprep.subr.bf16.mxu0 0
    %481 = vmatpush1.bf16.msra.mxu0 0
    %482 = vmatprep.subr.bf16.mxu0 0
    %483 = vmatpush1.bf16.msra.mxu0 0
    %484 = vmatprep.subr.bf16.mxu0 0
    %485 = vmatpush1.bf16.msra.mxu0 0
    %486 = vmatprep.subr.bf16.mxu0 0
    %487 = vmatpush1.bf16.msra.mxu0 0
    %488 = vmatprep.subr.bf16.mxu0 0
    %489 = vmatpush1.bf16.msra.mxu0 0
    %490 = vmatprep.subr.bf16.mxu0 0
    %491 = vmatpush1.bf16.msra.mxu0 0
    %492 = vmatprep.subr.bf16.mxu0 0
    %493 = vmatpush1.bf16.msra.mxu0 0
    %494 = vmatprep.subr.bf16.mxu0 0
    %495 = vmatpush1.bf16.msra.mxu0 0
    %496 = vmatprep.subr.bf16.mxu0 0
    %497 = vmatpush1.bf16.msra.mxu0 0
    %498 = vmatprep.subr.bf16.mxu0 0
    %499 = vmatpush1.bf16.msra.mxu0 0
    %500 = vmatprep.subr.bf16.mxu0 0
    %501 = vmatpush1.bf16.msra.mxu0 0
    %502 = vmatprep.subr.bf16.mxu0 0
    %503 = vmatpush1.bf16.msra.mxu0 0
    %504 = vmatprep.subr.bf16.mxu0 0
    %505 = vmatpush1.bf16.msra.mxu0 0
    %506 = vmatprep.mubr.bf16.mxu0 0
    %507 = vmatmul.mubr.bf16.gmra.mrb[0].mxu0 %v427
    %v508 = vpop.f32.mrb[0].mxu0
    %v509 = vadd.f32 %v188, %v508
    %v510 = vpop.f32.mrb[0].mxu0
    %v511 = vadd.f32 %v188, %v510
    %v512 = vpop.f32.mrb[0].mxu0
    %v513 = vadd.f32 %v193, %v512
    %v514 = vpop.f32.mrb[0].mxu0
    %v515 = vadd.f32 %v193, %v514
    %516 = vmatprep.mubr.bf16.mxu0 0
    %517 = vmatmul.mubr.bf16.gmra.mrb[0].mxu0 %v430
    %v518 = vpop.f32.mrb[0].mxu0
    %v519 = vadd.f32 %v198, %v518
    %v520 = vpop.f32.mrb[0].mxu0
    %v521 = vadd.f32 %v198, %v520
    %v522 = vpop.f32.mrb[0].mxu0
    %v523 = vadd.f32 %v203, %v522
    %v524 = vpop.f32.mrb[0].mxu0
    %v525 = vadd.f32 %v203, %v524
    %526 = vmatprep.mubr.bf16.mxu0 0
    %527 = vmatmul.mubr.bf16.gmra.mrb[0].mxu0 %v433
    %v528 = vpop.f32.mrb[0].mxu0
    %v529 = vadd.f32 %v208, %v528
    %v530 = vpop.f32.mrb[0].mxu0
    %v531 = vadd.f32 %v208, %v530
    %v532 = vpop.f32.mrb[0].mxu0
    %v533 = vadd.f32 %v213, %v532
    %v534 = vpop.f32.mrb[0].mxu0
    %v535 = vadd.f32 %v213, %v534
    %536 = vmatprep.mubr.bf16.mxu0 0
    %537 = vmatmul.mubr.bf16.gmra.mrb[0].mxu0 %v436
    %v538 = vpop.f32.mrb[0].mxu0
    %v539 = vadd.f32 %v218, %v538
    %v540 = vpop.f32.mrb[0].mxu0
    %v541 = vadd.f32 %v218, %v540
    %v542 = vpop.f32.mrb[0].mxu0
    %v543 = vadd.f32 %v223, %v542
    %v544 = vpop.f32.mrb[0].mxu0
    %v545 = vadd.f32 %v223, %v544
    %546 = vmatprep.mubr.bf16.mxu0 0
    %547 = vmatmul.mubr.bf16.gmra.mrb[0].mxu0 %v439
    %v548 = vpop.f32.mrb[0].mxu0
    %v549 = vadd.f32 %v228, %v548
    %v550 = vpop.f32.mrb[0].mxu0
    %v551 = vadd.f32 %v228, %v550
    %v552 = vpop.f32.mrb[0].mxu0
    %v553 = vadd.f32 %v233, %v552
    %v554 = vpop.f32.mrb[0].mxu0
    %v555 = vadd.f32 %v233, %v554
    %556 = vmatprep.mubr.bf16.mxu0 0
    %557 = vmatmul.mubr.bf16.gmra.mrb[0].mxu0 %v442
    %v558 = vpop.f32.mrb[0].mxu0
    %v559 = vadd.f32 %v238, %v558
    %v560 = vpop.f32.mrb[0].mxu0
    %v561 = vadd.f32 %v238, %v560
    %v562 = vpop.f32.mrb[0].mxu0
    %v563 = vadd.f32 %v243, %v562
    %v564 = vpop.f32.mrb[0].mxu0
    %v565 = vadd.f32 %v243, %v564
    %566 = vmatprep.mubr.bf16.mxu0 0
    %567 = vmatmul.mubr.bf16.gmra.mrb[0].mxu0 %v445
    %v568 = vpop.f32.mrb[0].mxu0
    %v569 = vadd.f32 %v248, %v568
    %v570 = vpop.f32.mrb[0].mxu0
    %v571 = vadd.f32 %v248, %v570
    %v572 = vpop.f32.mrb[0].mxu0
    %v573 = vadd.f32 %v253, %v572
    %v574 = vpop.f32.mrb[0].mxu0
    %v575 = vadd.f32 %v253, %v574
    %576 = vmatprep.mubr.bf16.mxu0 0
    %577 = vmatmul.mubr.bf16.gmra.mrb[0].mxu0 %v448
    %v578 = vpop.f32.mrb[0].mxu0
    %v579 = vadd.f32 %v258, %v578
    %v580 = vpop.f32.mrb[0].mxu0
    %v581 = vadd.f32 %v258, %v580
    %v582 = vpop.f32.mrb[0].mxu0
    %v583 = vadd.f32 %v263, %v582
    %v584 = vpop.f32.mrb[0].mxu0
    %v585 = vadd.f32 %v263, %v584
    %586 = vmatprep.mubr.bf16.mxu0 0
    %587 = vmatmul.mubr.bf16.gmra.mrb[0].mxu0 %v451
    %v588 = vpop.f32.mrb[0].mxu0
    %v589 = vadd.f32 %v268, %v588
    %v590 = vpop.f32.mrb[0].mxu0
    %v591 = vadd.f32 %v268, %v590
    %v592 = vpop.f32.mrb[0].mxu0
    %v593 = vadd.f32 %v273, %v592
    %v594 = vpop.f32.mrb[0].mxu0
    %v595 = vadd.f32 %v273, %v594
    %596 = vmatprep.mubr.bf16.mxu0 0
    %597 = vmatmul.mubr.bf16.gmra.mrb[0].mxu0 %v454
    %v598 = vpop.f32.mrb[0].mxu0
    %v599 = vadd.f32 %v278, %v598
    %v600 = vpop.f32.mrb[0].mxu0
    %v601 = vadd.f32 %v278, %v600
    %v602 = vpop.f32.mrb[0].mxu0
    %v603 = vadd.f32 %v283, %v602
    %v604 = vpop.f32.mrb[0].mxu0
    %v605 = vadd.f32 %v283, %v604
    %606 = vmatprep.mubr.bf16.mxu0 0
    %607 = vmatmul.mubr.bf16.gmra.mrb[0].mxu0 %v457
    %v608 = vpop.f32.mrb[0].mxu0
    %v609 = vadd.f32 %v288, %v608
    %v610 = vpop.f32.mrb[0].mxu0
    %v611 = vadd.f32 %v288, %v610
    %v612 = vpop.f32.mrb[0].mxu0
    %v613 = vadd.f32 %v293, %v612
    %v614 = vpop.f32.mrb[0].mxu0
    %v615 = vadd.f32 %v293, %v614
    %616 = vmatprep.mubr.bf16.mxu0 0
    %617 = vmatmul.mubr.bf16.gmra.mrb[0].mxu0 %v460
    %v618 = vpop.f32.mrb[0].mxu0
    %v619 = vadd.f32 %v298, %v618
    %v620 = vpop.f32.mrb[0].mxu0
    %v621 = vadd.f32 %v298, %v620
    %v622 = vpop.f32.mrb[0].mxu0
    %v623 = vadd.f32 %v303, %v622
    %v624 = vpop.f32.mrb[0].mxu0
    %v625 = vadd.f32 %v303, %v624
    %626 = vmatprep.mubr.bf16.mxu0 0
    %627 = vmatmul.mubr.bf16.gmra.mrb[0].mxu0 %v463
    %v628 = vpop.f32.mrb[0].mxu0
    %v629 = vadd.f32 %v308, %v628
    %v630 = vpop.f32.mrb[0].mxu0
    %v631 = vadd.f32 %v308, %v630
    %v632 = vpop.f32.mrb[0].mxu0
    %v633 = vadd.f32 %v313, %v632
    %v634 = vpop.f32.mrb[0].mxu0
    %v635 = vadd.f32 %v313, %v634
    %636 = vmatprep.mubr.bf16.mxu0 0
    %637 = vmatmul.mubr.bf16.gmra.mrb[0].mxu0 %v466
    %v638 = vpop.f32.mrb[0].mxu0
    %v639 = vadd.f32 %v318, %v638
    %v640 = vpop.f32.mrb[0].mxu0
    %v641 = vadd.f32 %v318, %v640
    %v642 = vpop.f32.mrb[0].mxu0
    %v643 = vadd.f32 %v323, %v642
    %v644 = vpop.f32.mrb[0].mxu0
    %v645 = vadd.f32 %v323, %v644
    %646 = vmatprep.mubr.bf16.mxu0 0
    %647 = vmatmul.mubr.bf16.gmra.mrb[0].mxu0 %v469
    %v648 = vpop.f32.mrb[0].mxu0
    %v649 = vadd.f32 %v328, %v648
    %v650 = vpop.f32.mrb[0].mxu0
    %v651 = vadd.f32 %v328, %v650
    %v652 = vpop.f32.mrb[0].mxu0
    %v653 = vadd.f32 %v333, %v652
    %v654 = vpop.f32.mrb[0].mxu0
    %v655 = vadd.f32 %v333, %v654
    %656 = vmatprep.mubr.bf16.mxu0 0
    %657 = vmatmul.mubr.bf16.gmra.mrb[0].mxu0 %v472
    %v658 = vpop.f32.mrb[0].mxu0
    %v659 = vadd.f32 %v338, %v658
    %v660 = vpop.f32.mrb[0].mxu0
    %v661 = vadd.f32 %v338, %v660
    %v662 = vpop.f32.mrb[0].mxu0
    %v663 = vadd.f32 %v343, %v662
    %v664 = vpop.f32.mrb[0].mxu0
    %v665 = vadd.f32 %v343, %v664
    %666 = vdwg.mxu0
    %v667 = vmax.f32 %v509, 0.0
    %v668 = vmax.f32 %v511, 0.0
    %v669 = vmax.f32 %v513, 0.0
    %v670 = vmax.f32 %v515, 0.0
    %v671 = vmax.f32 %v519, 0.0
    %v672 = vmax.f32 %v521, 0.0
    %v673 = vmax.f32 %v523, 0.0
    %v674 = vmax.f32 %v525, 0.0
    %v675 = vmax.f32 %v529, 0.0
    %v676 = vmax.f32 %v531, 0.0
    %v677 = vmax.f32 %v533, 0.0
    %v678 = vmax.f32 %v535, 0.0
    %v679 = vmax.f32 %v539, 0.0
    %v680 = vmax.f32 %v541, 0.0
    %v681 = vmax.f32 %v543, 0.0
    %v682 = vmax.f32 %v545, 0.0
    %v683 = vmax.f32 %v549, 0.0
    %v684 = vmax.f32 %v551, 0.0
    %v685 = vmax.f32 %v553, 0.0
    %v686 = vmax.f32 %v555, 0.0
    %v687 = vmax.f32 %v559, 0.0
    %v688 = vmax.f32 %v561, 0.0
    %v689 = vmax.f32 %v563, 0.0
    %v690 = vmax.f32 %v565, 0.0
    %v691 = vmax.f32 %v569, 0.0
    %v692 = vmax.f32 %v571, 0.0
    %v693 = vmax.f32 %v573, 0.0
    %v694 = vmax.f32 %v575, 0.0
    %v695 = vmax.f32 %v579, 0.0
    %v696 = vmax.f32 %v581, 0.0
    %v697 = vmax.f32 %v583, 0.0
    %v698 = vmax.f32 %v585, 0.0
    %v699 = vmax.f32 %v589, 0.0
    %v700 = vmax.f32 %v591, 0.0
    %v701 = vmax.f32 %v593, 0.0
    %v702 = vmax.f32 %v595, 0.0
    %v703 = vmax.f32 %v599, 0.0
    %v704 = vmax.f32 %v601, 0.0
    %v705 = vmax.f32 %v603, 0.0
    %v706 = vmax.f32 %v605, 0.0
    %v707 = vmax.f32 %v609, 0.0
    %v708 = vmax.f32 %v611, 0.0
    %v709 = vmax.f32 %v613, 0.0
    %v710 = vmax.f32 %v615, 0.0
    %v711 = vmax.f32 %v619, 0.0
    %v712 = vmax.f32 %v621, 0.0
    %v713 = vmax.f32 %v623, 0.0
    %v714 = vmax.f32 %v625, 0.0
    %v715 = vmax.f32 %v629, 0.0
    %v716 = vmax.f32 %v631, 0.0
    %v717 = vmax.f32 %v633, 0.0
    %v718 = vmax.f32 %v635, 0.0
    %v719 = vmax.f32 %v639, 0.0
    %v720 = vmax.f32 %v641, 0.0
    %v721 = vmax.f32 %v643, 0.0
    %v722 = vmax.f32 %v645, 0.0
    %v723 = vmax.f32 %v649, 0.0
    %v724 = vmax.f32 %v651, 0.0
    %v725 = vmax.f32 %v653, 0.0
    %v726 = vmax.f32 %v655, 0.0
    %v727 = vmax.f32 %v659, 0.0
    %v728 = vmax.f32 %v661, 0.0
    %v729 = vmax.f32 %v663, 0.0
    %v730 = vmax.f32 %v665, 0.0
    %v731 = vld [vmem:[%s3] sm:$0x3]
    %v732 = vld [vmem:[%s1 + $0x80] sm:$0xf]
    %v733 = vld [vmem:[%s1 + $0x84] sm:$0xf]
    %v734 = vld [vmem:[%s1 + $0x88] sm:$0xf]
    %v735 = vld [vmem:[%s1 + $0x8c] sm:$0xf]
    %v736 = vld [vmem:[%s1 + $0x90] sm:$0xf]
    %v737 = vld [vmem:[%s1 + $0x94] sm:$0xf]
    %v738 = vld [vmem:[%s1 + $0x98] sm:$0xf]
    %v739 = vld [vmem:[%s1 + $0x9c] sm:$0xf]
    %v740 = vld [vmem:[%s1 + $0xa0] sm:$0xf]
    %v741 = vld [vmem:[%s1 + $0xa4] sm:$0xf]
    %v742 = vld [vmem:[%s1 + $0xa8] sm:$0xf]
    %v743 = vld [vmem:[%s1 + $0xac] sm:$0xf]
    %v744 = vld [vmem:[%s1 + $0xb0] sm:$0xf]
    %v745 = vld [vmem:[%s1 + $0xb4] sm:$0xf]
    %v746 = vld [vmem:[%s1 + $0xb8] sm:$0xf]
    %v747 = vld [vmem:[%s1 + $0xbc] sm:$0xf]
    %v748 = vld [vmem:[%s1 + $0xc0] sm:$0xf]
    %v749 = vld [vmem:[%s1 + $0xc4] sm:$0xf]
    %v750 = vld [vmem:[%s1 + $0xc8] sm:$0xf]
    %v751 = vld [vmem:[%s1 + $0xcc] sm:$0xf]
    %v752 = vld [vmem:[%s1 + $0xd0] sm:$0xf]
    %v753 = vld [vmem:[%s1 + $0xd4] sm:$0xf]
    %v754 = vld [vmem:[%s1 + $0xd8] sm:$0xf]
    %v755 = vld [vmem:[%s1 + $0xdc] sm:$0xf]
    %v756 = vld [vmem:[%s1 + $0xe0] sm:$0xf]
    %v757 = vld [vmem:[%s1 + $0xe4] sm:$0xf]
    %v758 = vld [vmem:[%s1 + $0xe8] sm:$0xf]
    %v759 = vld [vmem:[%s1 + $0xec] sm:$0xf]
    %v760 = vld [vmem:[%s1 + $0xf0] sm:$0xf]
    %v761 = vld [vmem:[%s1 + $0xf4] sm:$0xf]
    %v762 = vld [vmem:[%s1 + $0xf8] sm:$0xf]
    %v763 = vld [vmem:[%s1 + $0xfc] sm:$0xf]
    %v764 = vld [vmem:[%s2 + $0x100] sm:$0xff]
    %v765 = vld [vmem:[%s2 + $0x108] sm:$0xff]
    %v766 = vld [vmem:[%s2 + $0x110] sm:$0xff]
    %v767 = vld [vmem:[%s2 + $0x118] sm:$0xff]
    %v768 = vld [vmem:[%s2 + $0x120] sm:$0xff]
    %v769 = vld [vmem:[%s2 + $0x128] sm:$0xff]
    %v770 = vld [vmem:[%s2 + $0x130] sm:$0xff]
    %v771 = vld [vmem:[%s2 + $0x138] sm:$0xff]
    %v772 = vld [vmem:[%s2 + $0x140] sm:$0xff]
    %v773 = vld [vmem:[%s2 + $0x148] sm:$0xff]
    %v774 = vld [vmem:[%s2 + $0x150] sm:$0xff]
    %v775 = vld [vmem:[%s2 + $0x158] sm:$0xff]
    %v776 = vld [vmem:[%s2 + $0x160] sm:$0xff]
    %v777 = vld [vmem:[%s2 + $0x168] sm:$0xff]
    %v778 = vld [vmem:[%s2 + $0x170] sm:$0xff]
    %v779 = vld [vmem:[%s2 + $0x178] sm:$0xff]
    %v780 = vld [vmem:[%s2 + $0x180] sm:$0xff]
    %v781 = vld [vmem:[%s2 + $0x188] sm:$0xff]
    %v782 = vld [vmem:[%s2 + $0x190] sm:$0xff]
    %v783 = vld [vmem:[%s2 + $0x198] sm:$0xff]
    %v784 = vld [vmem:[%s2 + $0x1a0] sm:$0xff]
    %v785 = vld [vmem:[%s2 + $0x1a8] sm:$0xff]
    %v786 = vld [vmem:[%s2 + $0x1b0] sm:$0xff]
    %v787 = vld [vmem:[%s2 + $0x1b8] sm:$0xff]
    %v788 = vld [vmem:[%s2 + $0x1c0] sm:$0xff]
    %v789 = vld [vmem:[%s2 + $0x1c8] sm:$0xff]
    %v790 = vld [vmem:[%s2 + $0x1d0] sm:$0xff]
    %v791 = vld [vmem:[%s2 + $0x1d8] sm:$0xff]
    %v792 = vld [vmem:[%s2 + $0x1e0] sm:$0xff]
    %v793 = vld [vmem:[%s2 + $0x1e8] sm:$0xff]
    %v794 = vld [vmem:[%s2 + $0x1f0] sm:$0xff]
    %v795 = vld [vmem:[%s2 + $0x1f8] sm:$0xff]
    %797 = vset.pattern.permute.xlu0 0
    %798 = vperm.xlu0 %797, %v764
    %v799 = vpop.permute.xlu0 %798
    %802 = vset.pattern.permute.xlu0 0
    %803 = vperm.xlu0 %802, %v765
    %v804 = vpop.permute.xlu0 %803
    %807 = vset.pattern.permute.xlu0 0
    %808 = vperm.xlu0 %807, %v766
    %v809 = vpop.permute.xlu0 %808
    %812 = vset.pattern.permute.xlu0 0
    %813 = vperm.xlu0 %812, %v767
    %v814 = vpop.permute.xlu0 %813
    %817 = vset.pattern.permute.xlu0 0
    %818 = vperm.xlu0 %817, %v768
    %v819 = vpop.permute.xlu0 %818
    %822 = vset.pattern.permute.xlu0 0
    %823 = vperm.xlu0 %822, %v769
    %v824 = vpop.permute.xlu0 %823
    %827 = vset.pattern.permute.xlu0 0
    %828 = vperm.xlu0 %827, %v770
    %v829 = vpop.permute.xlu0 %828
    %832 = vset.pattern.permute.xlu0 0
    %833 = vperm.xlu0 %832, %v771
    %v834 = vpop.permute.xlu0 %833
    %837 = vset.pattern.permute.xlu0 0
    %838 = vperm.xlu0 %837, %v772
    %v839 = vpop.permute.xlu0 %838
    %842 = vset.pattern.permute.xlu0 0
    %843 = vperm.xlu0 %842, %v773
    %v844 = vpop.permute.xlu0 %843
    %847 = vset.pattern.permute.xlu0 0
    %848 = vperm.xlu0 %847, %v774
    %v849 = vpop.permute.xlu0 %848
    %852 = vset.pattern.permute.xlu0 0
    %853 = vperm.xlu0 %852, %v775
    %v854 = vpop.permute.xlu0 %853
    %857 = vset.pattern.permute.xlu0 0
    %858 = vperm.xlu0 %857, %v776
    %v859 = vpop.permute.xlu0 %858
    %862 = vset.pattern.permute.xlu0 0
    %863 = vperm.xlu0 %862, %v777
    %v864 = vpop.permute.xlu0 %863
    %867 = vset.pattern.permute.xlu0 0
    %868 = vperm.xlu0 %867, %v778
    %v869 = vpop.permute.xlu0 %868
    %872 = vset.pattern.permute.xlu0 0
    %873 = vperm.xlu0 %872, %v779
    %v874 = vpop.permute.xlu0 %873
    %877 = vset.pattern.permute.xlu0 0
    %878 = vperm.xlu0 %877, %v780
    %v879 = vpop.permute.xlu0 %878
    %882 = vset.pattern.permute.xlu0 0
    %883 = vperm.xlu0 %882, %v781
    %v884 = vpop.permute.xlu0 %883
    %887 = vset.pattern.permute.xlu0 0
    %888 = vperm.xlu0 %887, %v782
    %v889 = vpop.permute.xlu0 %888
    %892 = vset.pattern.permute.xlu0 0
    %893 = vperm.xlu0 %892, %v783
    %v894 = vpop.permute.xlu0 %893
    %897 = vset.pattern.permute.xlu0 0
    %898 = vperm.xlu0 %897, %v784
    %v899 = vpop.permute.xlu0 %898
    %902 = vset.pattern.permute.xlu0 0
    %903 = vperm.xlu0 %902, %v785
    %v904 = vpop.permute.xlu0 %903
    %907 = vset.pattern.permute.xlu0 0
    %908 = vperm.xlu0 %907, %v786
    %v909 = vpop.permute.xlu0 %908
    %912 = vset.pattern.permute.xlu0 0
    %913 = vperm.xlu0 %912, %v787
    %v914 = vpop.permute.xlu0 %913
    %917 = vset.pattern.permute.xlu0 0
    %918 = vperm.xlu0 %917, %v788
    %v919 = vpop.permute.xlu0 %918
    %922 = vset.pattern.permute.xlu0 0
    %923 = vperm.xlu0 %922, %v789
    %v924 = vpop.permute.xlu0 %923
    %927 = vset.pattern.permute.xlu0 0
    %928 = vperm.xlu0 %927, %v790
    %v929 = vpop.permute.xlu0 %928
    %932 = vset.pattern.permute.xlu0 0
    %933 = vperm.xlu0 %932, %v791
    %v934 = vpop.permute.xlu0 %933
    %937 = vset.pattern.permute.xlu0 0
    %938 = vperm.xlu0 %937, %v792
    %v939 = vpop.permute.xlu0 %938
    %942 = vset.pattern.permute.xlu0 0
    %943 = vperm.xlu0 %942, %v793
    %v944 = vpop.permute.xlu0 %943
    %947 = vset.pattern.permute.xlu0 0
    %948 = vperm.xlu0 %947, %v794
    %v949 = vpop.permute.xlu0 %948
    %952 = vset.pattern.permute.xlu0 0
    %953 = vperm.xlu0 %952, %v795
    %v954 = vpop.permute.xlu0 %953
    %v988 = vunpack.c.l.b16 %v732
    %v989 = vunpack.c.l.b16 %v733
    %v990 = vunpack.c.l.b16 %v734
    %v991 = vunpack.c.l.b16 %v735
    %v992 = vunpack.c.l.b16 %v736
    %v993 = vunpack.c.l.b16 %v737
    %v994 = vunpack.c.l.b16 %v738
    %v995 = vunpack.c.l.b16 %v739
    %v996 = vunpack.c.l.b16 %v740
    %v997 = vunpack.c.l.b16 %v741
    %v998 = vunpack.c.l.b16 %v742
    %v999 = vunpack.c.l.b16 %v743
    %v1000 = vunpack.c.l.b16 %v744
    %v1001 = vunpack.c.l.b16 %v745
    %v1002 = vunpack.c.l.b16 %v746
    %v1003 = vunpack.c.l.b16 %v747
    %v1004 = vunpack.c.l.b16 %v748
    %v1005 = vunpack.c.l.b16 %v749
    %v1006 = vunpack.c.l.b16 %v750
    %v1007 = vunpack.c.l.b16 %v751
    %v1008 = vunpack.c.l.b16 %v752
    %v1009 = vunpack.c.l.b16 %v753
    %v1010 = vunpack.c.l.b16 %v754
    %v1011 = vunpack.c.l.b16 %v755
    %v1012 = vunpack.c.l.b16 %v756
    %v1013 = vunpack.c.l.b16 %v757
    %v1014 = vunpack.c.l.b16 %v758
    %v1015 = vunpack.c.l.b16 %v759
    %v1016 = vunpack.c.l.b16 %v760
    %v1017 = vunpack.c.l.b16 %v761
    %v1018 = vunpack.c.l.b16 %v762
    %v1019 = vunpack.c.l.b16 %v763
    %v1020 = vpack.c.b16 %v989, %v988
    %v1021 = vpack.c.b16 %v991, %v990
    %v1022 = vpack.c.b16 %v993, %v992
    %v1023 = vpack.c.b16 %v995, %v994
    %v1024 = vpack.c.b16 %v997, %v996
    %v1025 = vpack.c.b16 %v999, %v998
    %v1026 = vpack.c.b16 %v1001, %v1000
    %v1027 = vpack.c.b16 %v1003, %v1002
    %v1028 = vpack.c.b16 %v1005, %v1004
    %v1029 = vpack.c.b16 %v1007, %v1006
    %v1030 = vpack.c.b16 %v1009, %v1008
    %v1031 = vpack.c.b16 %v1011, %v1010
    %v1032 = vpack.c.b16 %v1013, %v1012
    %v1033 = vpack.c.b16 %v1015, %v1014
    %v1034 = vpack.c.b16 %v1017, %v1016
    %v1035 = vpack.c.b16 %v1019, %v1018
    %v1037 = vsel %vm425, %v1020, 0
    %v1040 = vsel %vm425, %v1021, 0
    %v1043 = vsel %vm425, %v1022, 0
    %v1046 = vsel %vm425, %v1023, 0
    %v1049 = vsel %vm425, %v1024, 0
    %v1052 = vsel %vm425, %v1025, 0
    %v1055 = vsel %vm425, %v1026, 0
    %v1058 = vsel %vm425, %v1027, 0
    %v1061 = vsel %vm425, %v1028, 0
    %v1064 = vsel %vm425, %v1029, 0
    %v1067 = vsel %vm425, %v1030, 0
    %v1070 = vsel %vm425, %v1031, 0
    %v1073 = vsel %vm425, %v1032, 0
    %v1076 = vsel %vm425, %v1033, 0
    %v1079 = vsel %vm425, %v1034, 0
    %v1082 = vsel %vm425, %v1035, 0
    %1084 = vmatprep.subr.bf16.mxu0 %v120
    %1085 = vmatpush1.bf16.msra.mxu0 %v119
    %1086 = vmatprep.subr.bf16.mxu0 0
    %1087 = vmatpush1.bf16.msra.mxu0 0
    %1088 = vmatprep.subr.bf16.mxu0 0
    %1089 = vmatpush1.bf16.msra.mxu0 0
    %1090 = vmatprep.subr.bf16.mxu0 0
    %1091 = vmatpush1.bf16.msra.mxu0 0
    %1092 = vmatprep.subr.bf16.mxu0 0
    %1093 = vmatpush1.bf16.msra.mxu0 0
    %1094 = vmatprep.subr.bf16.mxu0 0
    %1095 = vmatpush1.bf16.msra.mxu0 0
    %1096 = vmatprep.subr.bf16.mxu0 0
    %1097 = vmatpush1.bf16.msra.mxu0 0
    %1098 = vmatprep.subr.bf16.mxu0 0
    %1099 = vmatpush1.bf16.msra.mxu0 0
    %1100 = vmatprep.subr.bf16.mxu0 0
    %1101 = vmatpush1.bf16.msra.mxu0 0
    %1102 = vmatprep.subr.bf16.mxu0 0
    %1103 = vmatpush1.bf16.msra.mxu0 0
    %1104 = vmatprep.subr.bf16.mxu0 0
    %1105 = vmatpush1.bf16.msra.mxu0 0
    %1106 = vmatprep.subr.bf16.mxu0 0
    %1107 = vmatpush1.bf16.msra.mxu0 0
    %1108 = vmatprep.subr.bf16.mxu0 0
    %1109 = vmatpush1.bf16.msra.mxu0 0
    %1110 = vmatprep.subr.bf16.mxu0 0
    %1111 = vmatpush1.bf16.msra.mxu0 0
    %1112 = vmatprep.subr.bf16.mxu0 0
    %1113 = vmatpush1.bf16.msra.mxu0 0
    %1114 = vmatprep.subr.bf16.mxu0 0
    %1115 = vmatpush1.bf16.msra.mxu0 0
    %1116 = vmatprep.mubr.bf16.mxu0 0
    %1117 = vmatmul.mubr.bf16.gmra.mrb[0].mxu0 %v1037
    %v1118 = vpop.f32.mrb[0].mxu0
    %v1119 = vadd.f32 %v799, %v1118
    %v1120 = vpop.f32.mrb[0].mxu0
    %v1121 = vadd.f32 %v799, %v1120
    %v1122 = vpop.f32.mrb[0].mxu0
    %v1123 = vadd.f32 %v804, %v1122
    %v1124 = vpop.f32.mrb[0].mxu0
    %v1125 = vadd.f32 %v804, %v1124
    %1126 = vmatprep.mubr.bf16.mxu0 0
    %1127 = vmatmul.mubr.bf16.gmra.mrb[0].mxu0 %v1040
    %v1128 = vpop.f32.mrb[0].mxu0
    %v1129 = vadd.f32 %v809, %v1128
    %v1130 = vpop.f32.mrb[0].mxu0
    %v1131 = vadd.f32 %v809, %v1130
    %v1132 = vpop.f32.mrb[0].mxu0
    %v1133 = vadd.f32 %v814, %v1132
    %v1134 = vpop.f32.mrb[0].mxu0
    %v1135 = vadd.f32 %v814, %v1134
    %1136 = vmatprep.mubr.bf16.mxu0 0
    %1137 = vmatmul.mubr.bf16.gmra.mrb[0].mxu0 %v1043
    %v1138 = vpop.f32.mrb[0].mxu0
    %v1139 = vadd.f32 %v819, %v1138
    %v1140 = vpop.f32.mrb[0].mxu0
    %v1141 = vadd.f32 %v819, %v1140
    %v1142 = vpop.f32.mrb[0].mxu0
    %v1143 = vadd.f32 %v824, %v1142
    %v1144 = vpop.f32.mrb[0].mxu0
    %v1145 = vadd.f32 %v824, %v1144
    %1146 = vmatprep.mubr.bf16.mxu0 0
    %1147 = vmatmul.mubr.bf16.gmra.mrb[0].mxu0 %v1046
    %v1148 = vpop.f32.mrb[0].mxu0
    %v1149 = vadd.f32 %v829, %v1148
    %v1150 = vpop.f32.mrb[0].mxu0
    %v1151 = vadd.f32 %v829, %v1150
    %v1152 = vpop.f32.mrb[0].mxu0
    %v1153 = vadd.f32 %v834, %v1152
    %v1154 = vpop.f32.mrb[0].mxu0
    %v1155 = vadd.f32 %v834, %v1154
    %1156 = vmatprep.mubr.bf16.mxu0 0
    %1157 = vmatmul.mubr.bf16.gmra.mrb[0].mxu0 %v1049
    %v1158 = vpop.f32.mrb[0].mxu0
    %v1159 = vadd.f32 %v839, %v1158
    %v1160 = vpop.f32.mrb[0].mxu0
    %v1161 = vadd.f32 %v839, %v1160
    %v1162 = vpop.f32.mrb[0].mxu0
    %v1163 = vadd.f32 %v844, %v1162
    %v1164 = vpop.f32.mrb[0].mxu0
    %v1165 = vadd.f32 %v844, %v1164
    %1166 = vmatprep.mubr.bf16.mxu0 0
    %1167 = vmatmul.mubr.bf16.gmra.mrb[0].mxu0 %v1052
    %v1168 = vpop.f32.mrb[0].mxu0
    %v1169 = vadd.f32 %v849, %v1168
    %v1170 = vpop.f32.mrb[0].mxu0
    %v1171 = vadd.f32 %v849, %v1170
    %v1172 = vpop.f32.mrb[0].mxu0
    %v1173 = vadd.f32 %v854, %v1172
    %v1174 = vpop.f32.mrb[0].mxu0
    %v1175 = vadd.f32 %v854, %v1174
    %1176 = vmatprep.mubr.bf16.mxu0 0
    %1177 = vmatmul.mubr.bf16.gmra.mrb[0].mxu0 %v1055
    %v1178 = vpop.f32.mrb[0].mxu0
    %v1179 = vadd.f32 %v859, %v1178
    %v1180 = vpop.f32.mrb[0].mxu0
    %v1181 = vadd.f32 %v859, %v1180
    %v1182 = vpop.f32.mrb[0].mxu0
    %v1183 = vadd.f32 %v864, %v1182
    %v1184 = vpop.f32.mrb[0].mxu0
    %v1185 = vadd.f32 %v864, %v1184
    %1186 = vmatprep.mubr.bf16.mxu0 0
    %1187 = vmatmul.mubr.bf16.gmra.mrb[0].mxu0 %v1058
    %v1188 = vpop.f32.mrb[0].mxu0
    %v1189 = vadd.f32 %v869, %v1188
    %v1190 = vpop.f32.mrb[0].mxu0
    %v1191 = vadd.f32 %v869, %v1190
    %v1192 = vpop.f32.mrb[0].mxu0
    %v1193 = vadd.f32 %v874, %v1192
    %v1194 = vpop.f32.mrb[0].mxu0
    %v1195 = vadd.f32 %v874, %v1194
    %1196 = vmatprep.mubr.bf16.mxu0 0
    %1197 = vmatmul.mubr.bf16.gmra.mrb[0].mxu0 %v1061
    %v1198 = vpop.f32.mrb[0].mxu0
    %v1199 = vadd.f32 %v879, %v1198
    %v1200 = vpop.f32.mrb[0].mxu0
    %v1201 = vadd.f32 %v879, %v1200
    %v1202 = vpop.f32.mrb[0].mxu0
    %v1203 = vadd.f32 %v884, %v1202
    %v1204 = vpop.f32.mrb[0].mxu0
    %v1205 = vadd.f32 %v884, %v1204
    %1206 = vmatprep.mubr.bf16.mxu0 0
    %1207 = vmatmul.mubr.bf16.gmra.mrb[0].mxu0 %v1064
    %v1208 = vpop.f32.mrb[0].mxu0
    %v1209 = vadd.f32 %v889, %v1208
    %v1210 = vpop.f32.mrb[0].mxu0
    %v1211 = vadd.f32 %v889, %v1210
    %v1212 = vpop.f32.mrb[0].mxu0
    %v1213 = vadd.f32 %v894, %v1212
    %v1214 = vpop.f32.mrb[0].mxu0
    %v1215 = vadd.f32 %v894, %v1214
    %1216 = vmatprep.mubr.bf16.mxu0 0
    %1217 = vmatmul.mubr.bf16.gmra.mrb[0].mxu0 %v1067
    %v1218 = vpop.f32.mrb[0].mxu0
    %v1219 = vadd.f32 %v899, %v1218
    %v1220 = vpop.f32.mrb[0].mxu0
    %v1221 = vadd.f32 %v899, %v1220
    %v1222 = vpop.f32.mrb[0].mxu0
    %v1223 = vadd.f32 %v904, %v1222
    %v1224 = vpop.f32.mrb[0].mxu0
    %v1225 = vadd.f32 %v904, %v1224
    %1226 = vmatprep.mubr.bf16.mxu0 0
    %1227 = vmatmul.mubr.bf16.gmra.mrb[0].mxu0 %v1070
    %v1228 = vpop.f32.mrb[0].mxu0
    %v1229 = vadd.f32 %v909, %v1228
    %v1230 = vpop.f32.mrb[0].mxu0
    %v1231 = vadd.f32 %v909, %v1230
    %v1232 = vpop.f32.mrb[0].mxu0
    %v1233 = vadd.f32 %v914, %v1232
    %v1234 = vpop.f32.mrb[0].mxu0
    %v1235 = vadd.f32 %v914, %v1234
    %1236 = vmatprep.mubr.bf16.mxu0 0
    %1237 = vmatmul.mubr.bf16.gmra.mrb[0].mxu0 %v1073
    %v1238 = vpop.f32.mrb[0].mxu0
    %v1239 = vadd.f32 %v919, %v1238
    %v1240 = vpop.f32.mrb[0].mxu0
    %v1241 = vadd.f32 %v919, %v1240
    %v1242 = vpop.f32.mrb[0].mxu0
    %v1243 = vadd.f32 %v924, %v1242
    %v1244 = vpop.f32.mrb[0].mxu0
    %v1245 = vadd.f32 %v924, %v1244
    %1246 = vmatprep.mubr.bf16.mxu0 0
    %1247 = vmatmul.mubr.bf16.gmra.mrb[0].mxu0 %v1076
    %v1248 = vpop.f32.mrb[0].mxu0
    %v1249 = vadd.f32 %v929, %v1248
    %v1250 = vpop.f32.mrb[0].mxu0
    %v1251 = vadd.f32 %v929, %v1250
    %v1252 = vpop.f32.mrb[0].mxu0
    %v1253 = vadd.f32 %v934, %v1252
    %v1254 = vpop.f32.mrb[0].mxu0
    %v1255 = vadd.f32 %v934, %v1254
    %1256 = vmatprep.mubr.bf16.mxu0 0
    %1257 = vmatmul.mubr.bf16.gmra.mrb[0].mxu0 %v1079
    %v1258 = vpop.f32.mrb[0].mxu0
    %v1259 = vadd.f32 %v939, %v1258
    %v1260 = vpop.f32.mrb[0].mxu0
    %v1261 = vadd.f32 %v939, %v1260
    %v1262 = vpop.f32.mrb[0].mxu0
    %v1263 = vadd.f32 %v944, %v1262
    %v1264 = vpop.f32.mrb[0].mxu0
    %v1265 = vadd.f32 %v944, %v1264
    %1266 = vmatprep.mubr.bf16.mxu0 0
    %1267 = vmatmul.mubr.bf16.gmra.mrb[0].mxu0 %v1082
    %v1268 = vpop.f32.mrb[0].mxu0
    %v1269 = vadd.f32 %v949, %v1268
    %v1270 = vpop.f32.mrb[0].mxu0
    %v1271 = vadd.f32 %v949, %v1270
    %v1272 = vpop.f32.mrb[0].mxu0
    %v1273 = vadd.f32 %v954, %v1272
    %v1274 = vpop.f32.mrb[0].mxu0
    %v1275 = vadd.f32 %v954, %v1274
    %1276 = vdwg.mxu0
    %v1277 = vmax.f32 %v1119, 0.0
    %v1278 = vmax.f32 %v1121, 0.0
    %v1279 = vmax.f32 %v1123, 0.0
    %v1280 = vmax.f32 %v1125, 0.0
    %v1281 = vmax.f32 %v1129, 0.0
    %v1282 = vmax.f32 %v1131, 0.0
    %v1283 = vmax.f32 %v1133, 0.0
    %v1284 = vmax.f32 %v1135, 0.0
    %v1285 = vmax.f32 %v1139, 0.0
    %v1286 = vmax.f32 %v1141, 0.0
    %v1287 = vmax.f32 %v1143, 0.0
    %v1288 = vmax.f32 %v1145, 0.0
    %v1289 = vmax.f32 %v1149, 0.0
    %v1290 = vmax.f32 %v1151, 0.0
    %v1291 = vmax.f32 %v1153, 0.0
    %v1292 = vmax.f32 %v1155, 0.0
    %v1293 = vmax.f32 %v1159, 0.0
    %v1294 = vmax.f32 %v1161, 0.0
    %v1295 = vmax.f32 %v1163, 0.0
    %v1296 = vmax.f32 %v1165, 0.0
    %v1297 = vmax.f32 %v1169, 0.0
    %v1298 = vmax.f32 %v1171, 0.0
    %v1299 = vmax.f32 %v1173, 0.0
    %v1300 = vmax.f32 %v1175, 0.0
    %v1301 = vmax.f32 %v1179, 0.0
    %v1302 = vmax.f32 %v1181, 0.0
    %v1303 = vmax.f32 %v1183, 0.0
    %v1304 = vmax.f32 %v1185, 0.0
    %v1305 = vmax.f32 %v1189, 0.0
    %v1306 = vmax.f32 %v1191, 0.0
    %v1307 = vmax.f32 %v1193, 0.0
    %v1308 = vmax.f32 %v1195, 0.0
    %v1309 = vmax.f32 %v1199, 0.0
    %v1310 = vmax.f32 %v1201, 0.0
    %v1311 = vmax.f32 %v1203, 0.0
    %v1312 = vmax.f32 %v1205, 0.0
    %v1313 = vmax.f32 %v1209, 0.0
    %v1314 = vmax.f32 %v1211, 0.0
    %v1315 = vmax.f32 %v1213, 0.0
    %v1316 = vmax.f32 %v1215, 0.0
    %v1317 = vmax.f32 %v1219, 0.0
    %v1318 = vmax.f32 %v1221, 0.0
    %v1319 = vmax.f32 %v1223, 0.0
    %v1320 = vmax.f32 %v1225, 0.0
    %v1321 = vmax.f32 %v1229, 0.0
    %v1322 = vmax.f32 %v1231, 0.0
    %v1323 = vmax.f32 %v1233, 0.0
    %v1324 = vmax.f32 %v1235, 0.0
    %v1325 = vmax.f32 %v1239, 0.0
    %v1326 = vmax.f32 %v1241, 0.0
    %v1327 = vmax.f32 %v1243, 0.0
    %v1328 = vmax.f32 %v1245, 0.0
    %v1329 = vmax.f32 %v1249, 0.0
    %v1330 = vmax.f32 %v1251, 0.0
    %v1331 = vmax.f32 %v1253, 0.0
    %v1332 = vmax.f32 %v1255, 0.0
    %v1333 = vmax.f32 %v1259, 0.0
    %v1334 = vmax.f32 %v1261, 0.0
    %v1335 = vmax.f32 %v1263, 0.0
    %v1336 = vmax.f32 %v1265, 0.0
    %v1337 = vmax.f32 %v1269, 0.0
    %v1338 = vmax.f32 %v1271, 0.0
    %v1339 = vmax.f32 %v1273, 0.0
    %v1340 = vmax.f32 %v1275, 0.0
    %v1341 = vld [vmem:[%s3 + $0x2] sm:$0x3]
    %v1343 = vlaneseq
    %v1344 = vshrl.u32 %v1343, 7
    %v1345 = vsub.s32 0, %v1344
    %v1346 = vrot.slane %v1341, %v1345
    %v1347 = vlaneseq
    %v1348 = vshrl.u32 %v1347, 7
    %v1349 = vsub.s32 1, %v1348
    %v1350 = vrot.slane %v1341, %v1349
    %1353 = vmatprep.subr.mxu0 %v1278
    %1354 = vmatpush1.msra.mxu0 %v1277
    %1355 = vmatprep.subr.mxu0 %v1280
    %1356 = vmatpush1.msra.mxu0 %v1279
    %1357 = vmatprep.subr.mxu0 %v1282
    %1358 = vmatpush1.msra.mxu0 %v1281
    %1359 = vmatprep.subr.mxu0 %v1284
    %1360 = vmatpush1.msra.mxu0 %v1283
    %1361 = vmatprep.subr.mxu0 %v1286
    %1362 = vmatpush1.msra.mxu0 %v1285
    %1363 = vmatprep.subr.mxu0 %v1288
    %1364 = vmatpush1.msra.mxu0 %v1287
    %1365 = vmatprep.subr.mxu0 %v1290
    %1366 = vmatpush1.msra.mxu0 %v1289
    %1367 = vmatprep.subr.mxu0 %v1292
    %1368 = vmatpush1.msra.mxu0 %v1291
    %1369 = vmatprep.subr.mxu0 %v1294
    %1370 = vmatpush1.msra.mxu0 %v1293
    %1371 = vmatprep.subr.mxu0 %v1296
    %1372 = vmatpush1.msra.mxu0 %v1295
    %1373 = vmatprep.subr.mxu0 %v1298
    %1374 = vmatpush1.msra.mxu0 %v1297
    %1375 = vmatprep.subr.mxu0 %v1300
    %1376 = vmatpush1.msra.mxu0 %v1299
    %1377 = vmatprep.subr.mxu0 %v1302
    %1378 = vmatpush1.msra.mxu0 %v1301
    %1379 = vmatprep.subr.mxu0 %v1304
    %1380 = vmatpush1.msra.mxu0 %v1303
    %1381 = vmatprep.subr.mxu0 %v1306
    %1382 = vmatpush1.msra.mxu0 %v1305
    %1383 = vmatprep.subr.mxu0 %v1308
    %1384 = vmatpush1.msra.mxu0 %v1307
    %1385 = vmatprep.subr.mxu0 %v1310
    %1386 = vmatpush1.msra.mxu0 %v1309
    %1387 = vmatprep.subr.mxu0 %v1312
    %1388 = vmatpush1.msra.mxu0 %v1311
    %1389 = vmatprep.subr.mxu0 %v1314
    %1390 = vmatpush1.msra.mxu0 %v1313
    %1391 = vmatprep.subr.mxu0 %v1316
    %1392 = vmatpush1.msra.mxu0 %v1315
    %1393 = vmatprep.subr.mxu0 %v1318
    %1394 = vmatpush1.msra.mxu0 %v1317
    %1395 = vmatprep.subr.mxu0 %v1320
    %1396 = vmatpush1.msra.mxu0 %v1319
    %1397 = vmatprep.subr.mxu0 %v1322
    %1398 = vmatpush1.msra.mxu0 %v1321
    %1399 = vmatprep.subr.mxu0 %v1324
    %1400 = vmatpush1.msra.mxu0 %v1323
    %1401 = vmatprep.subr.mxu0 %v1326
    %1402 = vmatpush1.msra.mxu0 %v1325
    %1403 = vmatprep.subr.mxu0 %v1328
    %1404 = vmatpush1.msra.mxu0 %v1327
    %1405 = vmatprep.subr.mxu0 %v1330
    %1406 = vmatpush1.msra.mxu0 %v1329
    %1407 = vmatprep.subr.mxu0 %v1332
    %1408 = vmatpush1.msra.mxu0 %v1331
    %1409 = vmatprep.subr.mxu0 %v1334
    %1410 = vmatpush1.msra.mxu0 %v1333
    %1411 = vmatprep.subr.mxu0 %v1336
    %1412 = vmatpush1.msra.mxu0 %v1335
    %1413 = vmatprep.subr.mxu0 %v1338
    %1414 = vmatpush1.msra.mxu0 %v1337
    %1415 = vmatprep.subr.mxu0 %v1340
    %1416 = vmatpush1.msra.mxu0 %v1339
    %1417 = vmatprep.mubr.f32.mxu0 %v1350
    %1418 = vmatmul.mubr.f32.gmra.mrb[0].mxu0 %v1346
    %v1419 = vpop.f32.mrb[0].mxu0
    %v1420 = vadd.f32 0.0, %v1419
    %v1421 = vpop.f32.mrb[0].mxu0
    %v1422 = vadd.f32 0.0, %v1421
    %1423 = vdwg.mxu0
    %v1425 = vlaneseq
    %v1426 = vshrl.u32 %v1425, 7
    %v1427 = vsub.s32 0, %v1426
    %v1428 = vrot.slane %v731, %v1427
    %v1429 = vlaneseq
    %v1430 = vshrl.u32 %v1429, 7
    %v1431 = vsub.s32 1, %v1430
    %v1432 = vrot.slane %v731, %v1431
    %1435 = vmatprep.subr.mxu0 %v668
    %1436 = vmatpush1.msra.mxu0 %v667
    %1437 = vmatprep.subr.mxu0 %v670
    %1438 = vmatpush1.msra.mxu0 %v669
    %1439 = vmatprep.subr.mxu0 %v672
    %1440 = vmatpush1.msra.mxu0 %v671
    %1441 = vmatprep.subr.mxu0 %v674
    %1442 = vmatpush1.msra.mxu0 %v673
    %1443 = vmatprep.subr.mxu0 %v676
    %1444 = vmatpush1.msra.mxu0 %v675
    %1445 = vmatprep.subr.mxu0 %v678
    %1446 = vmatpush1.msra.mxu0 %v677
    %1447 = vmatprep.subr.mxu0 %v680
    %1448 = vmatpush1.msra.mxu0 %v679
    %1449 = vmatprep.subr.mxu0 %v682
    %1450 = vmatpush1.msra.mxu0 %v681
    %1451 = vmatprep.subr.mxu0 %v684
    %1452 = vmatpush1.msra.mxu0 %v683
    %1453 = vmatprep.subr.mxu0 %v686
    %1454 = vmatpush1.msra.mxu0 %v685
    %1455 = vmatprep.subr.mxu0 %v688
    %1456 = vmatpush1.msra.mxu0 %v687
    %1457 = vmatprep.subr.mxu0 %v690
    %1458 = vmatpush1.msra.mxu0 %v689
    %1459 = vmatprep.subr.mxu0 %v692
    %1460 = vmatpush1.msra.mxu0 %v691
    %1461 = vmatprep.subr.mxu0 %v694
    %1462 = vmatpush1.msra.mxu0 %v693
    %1463 = vmatprep.subr.mxu0 %v696
    %1464 = vmatpush1.msra.mxu0 %v695
    %1465 = vmatprep.subr.mxu0 %v698
    %1466 = vmatpush1.msra.mxu0 %v697
    %1467 = vmatprep.subr.mxu0 %v700
    %1468 = vmatpush1.msra.mxu0 %v699
    %1469 = vmatprep.subr.mxu0 %v702
    %1470 = vmatpush1.msra.mxu0 %v701
    %1471 = vmatprep.subr.mxu0 %v704
    %1472 = vmatpush1.msra.mxu0 %v703
    %1473 = vmatprep.subr.mxu0 %v706
    %1474 = vmatpush1.msra.mxu0 %v705
    %1475 = vmatprep.subr.mxu0 %v708
    %1476 = vmatpush1.msra.mxu0 %v707
    %1477 = vmatprep.subr.mxu0 %v710
    %1478 = vmatpush1.msra.mxu0 %v709
    %1479 = vmatprep.subr.mxu0 %v712
    %1480 = vmatpush1.msra.mxu0 %v711
    %1481 = vmatprep.subr.mxu0 %v714
    %1482 = vmatpush1.msra.mxu0 %v713
    %1483 = vmatprep.subr.mxu0 %v716
    %1484 = vmatpush1.msra.mxu0 %v715
    %1485 = vmatprep.subr.mxu0 %v718
    %1486 = vmatpush1.msra.mxu0 %v717
    %1487 = vmatprep.subr.mxu0 %v720
    %1488 = vmatpush1.msra.mxu0 %v719
    %1489 = vmatprep.subr.mxu0 %v722
    %1490 = vmatpush1.msra.mxu0 %v721
    %1491 = vmatprep.subr.mxu0 %v724
    %1492 = vmatpush1.msra.mxu0 %v723
    %1493 = vmatprep.subr.mxu0 %v726
    %1494 = vmatpush1.msra.mxu0 %v725
    %1495 = vmatprep.subr.mxu0 %v728
    %1496 = vmatpush1.msra.mxu0 %v727
    %1497 = vmatprep.subr.mxu0 %v730
    %1498 = vmatpush1.msra.mxu0 %v729
    %1499 = vmatprep.mubr.f32.mxu0 %v1432
    %1500 = vmatmul.mubr.f32.gmra.mrb[0].mxu0 %v1428
    %v1501 = vpop.f32.mrb[0].mxu0
    %v1502 = vadd.f32 %v1420, %v1501
    %v1503 = vpop.f32.mrb[0].mxu0
    %v1504 = vadd.f32 %v1422, %v1503
    %1505 = vdwg.mxu0
    %v1506 = vld [vmem:[%s1 + $0x100] sm:$0xf]
    %v1507 = vld [vmem:[%s1 + $0x104] sm:$0xf]
    %v1508 = vld [vmem:[%s1 + $0x108] sm:$0xf]
    %v1509 = vld [vmem:[%s1 + $0x10c] sm:$0xf]
    %v1510 = vld [vmem:[%s1 + $0x110] sm:$0xf]
    %v1511 = vld [vmem:[%s1 + $0x114] sm:$0xf]
    %v1512 = vld [vmem:[%s1 + $0x118] sm:$0xf]
    %v1513 = vld [vmem:[%s1 + $0x11c] sm:$0xf]
    %v1514 = vld [vmem:[%s1 + $0x120] sm:$0xf]
    %v1515 = vld [vmem:[%s1 + $0x124] sm:$0xf]
    %v1516 = vld [vmem:[%s1 + $0x128] sm:$0xf]
    %v1517 = vld [vmem:[%s1 + $0x12c] sm:$0xf]
    %v1518 = vld [vmem:[%s1 + $0x130] sm:$0xf]
    %v1519 = vld [vmem:[%s1 + $0x134] sm:$0xf]
    %v1520 = vld [vmem:[%s1 + $0x138] sm:$0xf]
    %v1521 = vld [vmem:[%s1 + $0x13c] sm:$0xf]
    %v1522 = vld [vmem:[%s1 + $0x140] sm:$0xf]
    %v1523 = vld [vmem:[%s1 + $0x144] sm:$0xf]
    %v1524 = vld [vmem:[%s1 + $0x148] sm:$0xf]
    %v1525 = vld [vmem:[%s1 + $0x14c] sm:$0xf]
    %v1526 = vld [vmem:[%s1 + $0x150] sm:$0xf]
    %v1527 = vld [vmem:[%s1 + $0x154] sm:$0xf]
    %v1528 = vld [vmem:[%s1 + $0x158] sm:$0xf]
    %v1529 = vld [vmem:[%s1 + $0x15c] sm:$0xf]
    %v1530 = vld [vmem:[%s1 + $0x160] sm:$0xf]
    %v1531 = vld [vmem:[%s1 + $0x164] sm:$0xf]
    %v1532 = vld [vmem:[%s1 + $0x168] sm:$0xf]
    %v1533 = vld [vmem:[%s1 + $0x16c] sm:$0xf]
    %v1534 = vld [vmem:[%s1 + $0x170] sm:$0xf]
    %v1535 = vld [vmem:[%s1 + $0x174] sm:$0xf]
    %v1536 = vld [vmem:[%s1 + $0x178] sm:$0xf]
    %v1537 = vld [vmem:[%s1 + $0x17c] sm:$0xf]
    %v1538 = vld [vmem:[%s2 + $0x200] sm:$0xff]
    %v1539 = vld [vmem:[%s2 + $0x208] sm:$0xff]
    %v1540 = vld [vmem:[%s2 + $0x210] sm:$0xff]
    %v1541 = vld [vmem:[%s2 + $0x218] sm:$0xff]
    %v1542 = vld [vmem:[%s2 + $0x220] sm:$0xff]
    %v1543 = vld [vmem:[%s2 + $0x228] sm:$0xff]
    %v1544 = vld [vmem:[%s2 + $0x230] sm:$0xff]
    %v1545 = vld [vmem:[%s2 + $0x238] sm:$0xff]
    %v1546 = vld [vmem:[%s2 + $0x240] sm:$0xff]
    %v1547 = vld [vmem:[%s2 + $0x248] sm:$0xff]
    %v1548 = vld [vmem:[%s2 + $0x250] sm:$0xff]
    %v1549 = vld [vmem:[%s2 + $0x258] sm:$0xff]
    %v1550 = vld [vmem:[%s2 + $0x260] sm:$0xff]
    %v1551 = vld [vmem:[%s2 + $0x268] sm:$0xff]
    %v1552 = vld [vmem:[%s2 + $0x270] sm:$0xff]
    %v1553 = vld [vmem:[%s2 + $0x278] sm:$0xff]
    %v1554 = vld [vmem:[%s2 + $0x280] sm:$0xff]
    %v1555 = vld [vmem:[%s2 + $0x288] sm:$0xff]
    %v1556 = vld [vmem:[%s2 + $0x290] sm:$0xff]
    %v1557 = vld [vmem:[%s2 + $0x298] sm:$0xff]
    %v1558 = vld [vmem:[%s2 + $0x2a0] sm:$0xff]
    %v1559 = vld [vmem:[%s2 + $0x2a8] sm:$0xff]
    %v1560 = vld [vmem:[%s2 + $0x2b0] sm:$0xff]
    %v1561 = vld [vmem:[%s2 + $0x2b8] sm:$0xff]
    %v1562 = vld [vmem:[%s2 + $0x2c0] sm:$0xff]
    %v1563 = vld [vmem:[%s2 + $0x2c8] sm:$0xff]
    %v1564 = vld [vmem:[%s2 + $0x2d0] sm:$0xff]
    %v1565 = vld [vmem:[%s2 + $0x2d8] sm:$0xff]
    %v1566 = vld [vmem:[%s2 + $0x2e0] sm:$0xff]
    %v1567 = vld [vmem:[%s2 + $0x2e8] sm:$0xff]
    %v1568 = vld [vmem:[%s2 + $0x2f0] sm:$0xff]
    %v1569 = vld [vmem:[%s2 + $0x2f8] sm:$0xff]
    %1571 = vset.pattern.permute.xlu0 0
    %1572 = vperm.xlu0 %1571, %v1538
    %v1573 = vpop.permute.xlu0 %1572
    %1576 = vset.pattern.permute.xlu0 0
    %1577 = vperm.xlu0 %1576, %v1539
    %v1578 = vpop.permute.xlu0 %1577
    %1581 = vset.pattern.permute.xlu0 0
    %1582 = vperm.xlu0 %1581, %v1540
    %v1583 = vpop.permute.xlu0 %1582
    %1586 = vset.pattern.permute.xlu0 0
    %1587 = vperm.xlu0 %1586, %v1541
    %v1588 = vpop.permute.xlu0 %1587
    %1591 = vset.pattern.permute.xlu0 0
    %1592 = vperm.xlu0 %1591, %v1542
    %v1593 = vpop.permute.xlu0 %1592
    %1596 = vset.pattern.permute.xlu0 0
    %1597 = vperm.xlu0 %1596, %v1543
    %v1598 = vpop.permute.xlu0 %1597
    %1601 = vset.pattern.permute.xlu0 0
    %1602 = vperm.xlu0 %1601, %v1544
    %v1603 = vpop.permute.xlu0 %1602
    %1606 = vset.pattern.permute.xlu0 0
    %1607 = vperm.xlu0 %1606, %v1545
    %v1608 = vpop.permute.xlu0 %1607
    %1611 = vset.pattern.permute.xlu0 0
    %1612 = vperm.xlu0 %1611, %v1546
    %v1613 = vpop.permute.xlu0 %1612
    %1616 = vset.pattern.permute.xlu0 0
    %1617 = vperm.xlu0 %1616, %v1547
    %v1618 = vpop.permute.xlu0 %1617
    %1621 = vset.pattern.permute.xlu0 0
    %1622 = vperm.xlu0 %1621, %v1548
    %v1623 = vpop.permute.xlu0 %1622
    %1626 = vset.pattern.permute.xlu0 0
    %1627 = vperm.xlu0 %1626, %v1549
    %v1628 = vpop.permute.xlu0 %1627
    %1631 = vset.pattern.permute.xlu0 0
    %1632 = vperm.xlu0 %1631, %v1550
    %v1633 = vpop.permute.xlu0 %1632
    %1636 = vset.pattern.permute.xlu0 0
    %1637 = vperm.xlu0 %1636, %v1551
    %v1638 = vpop.permute.xlu0 %1637
    %1641 = vset.pattern.permute.xlu0 0
    %1642 = vperm.xlu0 %1641, %v1552
    %v1643 = vpop.permute.xlu0 %1642
    %1646 = vset.pattern.permute.xlu0 0
    %1647 = vperm.xlu0 %1646, %v1553
    %v1648 = vpop.permute.xlu0 %1647
    %1651 = vset.pattern.permute.xlu0 0
    %1652 = vperm.xlu0 %1651, %v1554
    %v1653 = vpop.permute.xlu0 %1652
    %1656 = vset.pattern.permute.xlu0 0
    %1657 = vperm.xlu0 %1656, %v1555
    %v1658 = vpop.permute.xlu0 %1657
    %1661 = vset.pattern.permute.xlu0 0
    %1662 = vperm.xlu0 %1661, %v1556
    %v1663 = vpop.permute.xlu0 %1662
    %1666 = vset.pattern.permute.xlu0 0
    %1667 = vperm.xlu0 %1666, %v1557
    %v1668 = vpop.permute.xlu0 %1667
    %1671 = vset.pattern.permute.xlu0 0
    %1672 = vperm.xlu0 %1671, %v1558
    %v1673 = vpop.permute.xlu0 %1672
    %1676 = vset.pattern.permute.xlu0 0
    %1677 = vperm.xlu0 %1676, %v1559
    %v1678 = vpop.permute.xlu0 %1677
    %1681 = vset.pattern.permute.xlu0 0
    %1682 = vperm.xlu0 %1681, %v1560
    %v1683 = vpop.permute.xlu0 %1682
    %1686 = vset.pattern.permute.xlu0 0
    %1687 = vperm.xlu0 %1686, %v1561
    %v1688 = vpop.permute.xlu0 %1687
    %1691 = vset.pattern.permute.xlu0 0
    %1692 = vperm.xlu0 %1691, %v1562
    %v1693 = vpop.permute.xlu0 %1692
    %1696 = vset.pattern.permute.xlu0 0
    %1697 = vperm.xlu0 %1696, %v1563
    %v1698 = vpop.permute.xlu0 %1697
    %1701 = vset.pattern.permute.xlu0 0
    %1702 = vperm.xlu0 %1701, %v1564
    %v1703 = vpop.permute.xlu0 %1702
    %1706 = vset.pattern.permute.xlu0 0
    %1707 = vperm.xlu0 %1706, %v1565
    %v1708 = vpop.permute.xlu0 %1707
    %1711 = vset.pattern.permute.xlu0 0
    %1712 = vperm.xlu0 %1711, %v1566
    %v1713 = vpop.permute.xlu0 %1712
    %1716 = vset.pattern.permute.xlu0 0
    %1717 = vperm.xlu0 %1716, %v1567
    %v1718 = vpop.permute.xlu0 %1717
    %1721 = vset.pattern.permute.xlu0 0
    %1722 = vperm.xlu0 %1721, %v1568
    %v1723 = vpop.permute.xlu0 %1722
    %1726 = vset.pattern.permute.xlu0 0
    %1727 = vperm.xlu0 %1726, %v1569
    %v1728 = vpop.permute.xlu0 %1727
    %v1762 = vunpack.c.l.b16 %v1506
    %v1763 = vunpack.c.l.b16 %v1507
    %v1764 = vunpack.c.l.b16 %v1508
    %v1765 = vunpack.c.l.b16 %v1509
    %v1766 = vunpack.c.l.b16 %v1510
    %v1767 = vunpack.c.l.b16 %v1511
    %v1768 = vunpack.c.l.b16 %v1512
    %v1769 = vunpack.c.l.b16 %v1513
    %v1770 = vunpack.c.l.b16 %v1514
    %v1771 = vunpack.c.l.b16 %v1515
    %v1772 = vunpack.c.l.b16 %v1516
    %v1773 = vunpack.c.l.b16 %v1517
    %v1774 = vunpack.c.l.b16 %v1518
    %v1775 = vunpack.c.l.b16 %v1519
    %v1776 = vunpack.c.l.b16 %v1520
    %v1777 = vunpack.c.l.b16 %v1521
    %v1778 = vunpack.c.l.b16 %v1522
    %v1779 = vunpack.c.l.b16 %v1523
    %v1780 = vunpack.c.l.b16 %v1524
    %v1781 = vunpack.c.l.b16 %v1525
    %v1782 = vunpack.c.l.b16 %v1526
    %v1783 = vunpack.c.l.b16 %v1527
    %v1784 = vunpack.c.l.b16 %v1528
    %v1785 = vunpack.c.l.b16 %v1529
    %v1786 = vunpack.c.l.b16 %v1530
    %v1787 = vunpack.c.l.b16 %v1531
    %v1788 = vunpack.c.l.b16 %v1532
    %v1789 = vunpack.c.l.b16 %v1533
    %v1790 = vunpack.c.l.b16 %v1534
    %v1791 = vunpack.c.l.b16 %v1535
    %v1792 = vunpack.c.l.b16 %v1536
    %v1793 = vunpack.c.l.b16 %v1537
    %v1794 = vpack.c.b16 %v1763, %v1762
    %v1795 = vpack.c.b16 %v1765, %v1764
    %v1796 = vpack.c.b16 %v1767, %v1766
    %v1797 = vpack.c.b16 %v1769, %v1768
    %v1798 = vpack.c.b16 %v1771, %v1770
    %v1799 = vpack.c.b16 %v1773, %v1772
    %v1800 = vpack.c.b16 %v1775, %v1774
    %v1801 = vpack.c.b16 %v1777, %v1776
    %v1802 = vpack.c.b16 %v1779, %v1778
    %v1803 = vpack.c.b16 %v1781, %v1780
    %v1804 = vpack.c.b16 %v1783, %v1782
    %v1805 = vpack.c.b16 %v1785, %v1784
    %v1806 = vpack.c.b16 %v1787, %v1786
    %v1807 = vpack.c.b16 %v1789, %v1788
    %v1808 = vpack.c.b16 %v1791, %v1790
    %v1809 = vpack.c.b16 %v1793, %v1792
    %v1811 = vsel %vm425, %v1794, 0
    %v1814 = vsel %vm425, %v1795, 0
    %v1817 = vsel %vm425, %v1796, 0
    %v1820 = vsel %vm425, %v1797, 0
    %v1823 = vsel %vm425, %v1798, 0
    %v1826 = vsel %vm425, %v1799, 0
    %v1829 = vsel %vm425, %v1800, 0
    %v1832 = vsel %vm425, %v1801, 0
    %v1835 = vsel %vm425, %v1802, 0
    %v1838 = vsel %vm425, %v1803, 0
    %v1841 = vsel %vm425, %v1804, 0
    %v1844 = vsel %vm425, %v1805, 0
    %v1847 = vsel %vm425, %v1806, 0
    %v1850 = vsel %vm425, %v1807, 0
    %v1853 = vsel %vm425, %v1808, 0
    %v1856 = vsel %vm425, %v1809, 0
    %1858 = vmatprep.subr.bf16.mxu0 %v120
    %1859 = vmatpush1.bf16.msra.mxu0 %v119
    %1860 = vmatprep.subr.bf16.mxu0 0
    %1861 = vmatpush1.bf16.msra.mxu0 0
    %1862 = vmatprep.subr.bf16.mxu0 0
    %1863 = vmatpush1.bf16.msra.mxu0 0
    %1864 = vmatprep.subr.bf16.mxu0 0
    %1865 = vmatpush1.bf16.msra.mxu0 0
    %1866 = vmatprep.subr.bf16.mxu0 0
    %1867 = vmatpush1.bf16.msra.mxu0 0
    %1868 = vmatprep.subr.bf16.mxu0 0
    %1869 = vmatpush1.bf16.msra.mxu0 0
    %1870 = vmatprep.subr.bf16.mxu0 0
    %1871 = vmatpush1.bf16.msra.mxu0 0
    %1872 = vmatprep.subr.bf16.mxu0 0
    %1873 = vmatpush1.bf16.msra.mxu0 0
    %1874 = vmatprep.subr.bf16.mxu0 0
    %1875 = vmatpush1.bf16.msra.mxu0 0
    %1876 = vmatprep.subr.bf16.mxu0 0
    %1877 = vmatpush1.bf16.msra.mxu0 0
    %1878 = vmatprep.subr.bf16.mxu0 0
    %1879 = vmatpush1.bf16.msra.mxu0 0
    %1880 = vmatprep.subr.bf16.mxu0 0
    %1881 = vmatpush1.bf16.msra.mxu0 0
    %1882 = vmatprep.subr.bf16.mxu0 0
    %1883 = vmatpush1.bf16.msra.mxu0 0
    %1884 = vmatprep.subr.bf16.mxu0 0
    %1885 = vmatpush1.bf16.msra.mxu0 0
    %1886 = vmatprep.subr.bf16.mxu0 0
    %1887 = vmatpush1.bf16.msra.mxu0 0
    %1888 = vmatprep.subr.bf16.mxu0 0
    %1889 = vmatpush1.bf16.msra.mxu0 0
    %1890 = vmatprep.mubr.bf16.mxu0 0
    %1891 = vmatmul.mubr.bf16.gmra.mrb[0].mxu0 %v1811
    %v1892 = vpop.f32.mrb[0].mxu0
    %v1893 = vadd.f32 %v1573, %v1892
    %v1894 = vpop.f32.mrb[0].mxu0
    %v1895 = vadd.f32 %v1573, %v1894
    %v1896 = vpop.f32.mrb[0].mxu0
    %v1897 = vadd.f32 %v1578, %v1896
    %v1898 = vpop.f32.mrb[0].mxu0
    %v1899 = vadd.f32 %v1578, %v1898
    %1900 = vmatprep.mubr.bf16.mxu0 0
    %1901 = vmatmul.mubr.bf16.gmra.mrb[0].mxu0 %v1814
    %v1902 = vpop.f32.mrb[0].mxu0
    %v1903 = vadd.f32 %v1583, %v1902
    %v1904 = vpop.f32.mrb[0].mxu0
    %v1905 = vadd.f32 %v1583, %v1904
    %v1906 = vpop.f32.mrb[0].mxu0
    %v1907 = vadd.f32 %v1588, %v1906
    %v1908 = vpop.f32.mrb[0].mxu0
    %v1909 = vadd.f32 %v1588, %v1908
    %1910 = vmatprep.mubr.bf16.mxu0 0
    %1911 = vmatmul.mubr.bf16.gmra.mrb[0].mxu0 %v1817
    %v1912 = vpop.f32.mrb[0].mxu0
    %v1913 = vadd.f32 %v1593, %v1912
    %v1914 = vpop.f32.mrb[0].mxu0
    %v1915 = vadd.f32 %v1593, %v1914
    %v1916 = vpop.f32.mrb[0].mxu0
    %v1917 = vadd.f32 %v1598, %v1916
    %v1918 = vpop.f32.mrb[0].mxu0
    %v1919 = vadd.f32 %v1598, %v1918
    %1920 = vmatprep.mubr.bf16.mxu0 0
    %1921 = vmatmul.mubr.bf16.gmra.mrb[0].mxu0 %v1820
    %v1922 = vpop.f32.mrb[0].mxu0
    %v1923 = vadd.f32 %v1603, %v1922
    %v1924 = vpop.f32.mrb[0].mxu0
    %v1925 = vadd.f32 %v1603, %v1924
    %v1926 = vpop.f32.mrb[0].mxu0
    %v1927 = vadd.f32 %v1608, %v1926
    %v1928 = vpop.f32.mrb[0].mxu0
    %v1929 = vadd.f32 %v1608, %v1928
    %1930 = vmatprep.mubr.bf16.mxu0 0
    %1931 = vmatmul.mubr.bf16.gmra.mrb[0].mxu0 %v1823
    %v1932 = vpop.f32.mrb[0].mxu0
    %v1933 = vadd.f32 %v1613, %v1932
    %v1934 = vpop.f32.mrb[0].mxu0
    %v1935 = vadd.f32 %v1613, %v1934
    %v1936 = vpop.f32.mrb[0].mxu0
    %v1937 = vadd.f32 %v1618, %v1936
    %v1938 = vpop.f32.mrb[0].mxu0
    %v1939 = vadd.f32 %v1618, %v1938
    %1940 = vmatprep.mubr.bf16.mxu0 0
    %1941 = vmatmul.mubr.bf16.gmra.mrb[0].mxu0 %v1826
    %v1942 = vpop.f32.mrb[0].mxu0
    %v1943 = vadd.f32 %v1623, %v1942
    %v1944 = vpop.f32.mrb[0].mxu0
    %v1945 = vadd.f32 %v1623, %v1944
    %v1946 = vpop.f32.mrb[0].mxu0
    %v1947 = vadd.f32 %v1628, %v1946
    %v1948 = vpop.f32.mrb[0].mxu0
    %v1949 = vadd.f32 %v1628, %v1948
    %1950 = vmatprep.mubr.bf16.mxu0 0
    %1951 = vmatmul.mubr.bf16.gmra.mrb[0].mxu0 %v1829
    %v1952 = vpop.f32.mrb[0].mxu0
    %v1953 = vadd.f32 %v1633, %v1952
    %v1954 = vpop.f32.mrb[0].mxu0
    %v1955 = vadd.f32 %v1633, %v1954
    %v1956 = vpop.f32.mrb[0].mxu0
    %v1957 = vadd.f32 %v1638, %v1956
    %v1958 = vpop.f32.mrb[0].mxu0
    %v1959 = vadd.f32 %v1638, %v1958
    %1960 = vmatprep.mubr.bf16.mxu0 0
    %1961 = vmatmul.mubr.bf16.gmra.mrb[0].mxu0 %v1832
    %v1962 = vpop.f32.mrb[0].mxu0
    %v1963 = vadd.f32 %v1643, %v1962
    %v1964 = vpop.f32.mrb[0].mxu0
    %v1965 = vadd.f32 %v1643, %v1964
    %v1966 = vpop.f32.mrb[0].mxu0
    %v1967 = vadd.f32 %v1648, %v1966
    %v1968 = vpop.f32.mrb[0].mxu0
    %v1969 = vadd.f32 %v1648, %v1968
    %1970 = vmatprep.mubr.bf16.mxu0 0
    %1971 = vmatmul.mubr.bf16.gmra.mrb[0].mxu0 %v1835
    %v1972 = vpop.f32.mrb[0].mxu0
    %v1973 = vadd.f32 %v1653, %v1972
    %v1974 = vpop.f32.mrb[0].mxu0
    %v1975 = vadd.f32 %v1653, %v1974
    %v1976 = vpop.f32.mrb[0].mxu0
    %v1977 = vadd.f32 %v1658, %v1976
    %v1978 = vpop.f32.mrb[0].mxu0
    %v1979 = vadd.f32 %v1658, %v1978
    %1980 = vmatprep.mubr.bf16.mxu0 0
    %1981 = vmatmul.mubr.bf16.gmra.mrb[0].mxu0 %v1838
    %v1982 = vpop.f32.mrb[0].mxu0
    %v1983 = vadd.f32 %v1663, %v1982
    %v1984 = vpop.f32.mrb[0].mxu0
    %v1985 = vadd.f32 %v1663, %v1984
    %v1986 = vpop.f32.mrb[0].mxu0
    %v1987 = vadd.f32 %v1668, %v1986
    %v1988 = vpop.f32.mrb[0].mxu0
    %v1989 = vadd.f32 %v1668, %v1988
    %1990 = vmatprep.mubr.bf16.mxu0 0
    %1991 = vmatmul.mubr.bf16.gmra.mrb[0].mxu0 %v1841
    %v1992 = vpop.f32.mrb[0].mxu0
    %v1993 = vadd.f32 %v1673, %v1992
    %v1994 = vpop.f32.mrb[0].mxu0
    %v1995 = vadd.f32 %v1673, %v1994
    %v1996 = vpop.f32.mrb[0].mxu0
    %v1997 = vadd.f32 %v1678, %v1996
    %v1998 = vpop.f32.mrb[0].mxu0
    %v1999 = vadd.f32 %v1678, %v1998
    %2000 = vmatprep.mubr.bf16.mxu0 0
    %2001 = vmatmul.mubr.bf16.gmra.mrb[0].mxu0 %v1844
    %v2002 = vpop.f32.mrb[0].mxu0
    %v2003 = vadd.f32 %v1683, %v2002
    %v2004 = vpop.f32.mrb[0].mxu0
    %v2005 = vadd.f32 %v1683, %v2004
    %v2006 = vpop.f32.mrb[0].mxu0
    %v2007 = vadd.f32 %v1688, %v2006
    %v2008 = vpop.f32.mrb[0].mxu0
    %v2009 = vadd.f32 %v1688, %v2008
    %2010 = vmatprep.mubr.bf16.mxu0 0
    %2011 = vmatmul.mubr.bf16.gmra.mrb[0].mxu0 %v1847
    %v2012 = vpop.f32.mrb[0].mxu0
    %v2013 = vadd.f32 %v1693, %v2012
    %v2014 = vpop.f32.mrb[0].mxu0
    %v2015 = vadd.f32 %v1693, %v2014
    %v2016 = vpop.f32.mrb[0].mxu0
    %v2017 = vadd.f32 %v1698, %v2016
    %v2018 = vpop.f32.mrb[0].mxu0
    %v2019 = vadd.f32 %v1698, %v2018
    %2020 = vmatprep.mubr.bf16.mxu0 0
    %2021 = vmatmul.mubr.bf16.gmra.mrb[0].mxu0 %v1850
    %v2022 = vpop.f32.mrb[0].mxu0
    %v2023 = vadd.f32 %v1703, %v2022
    %v2024 = vpop.f32.mrb[0].mxu0
    %v2025 = vadd.f32 %v1703, %v2024
    %v2026 = vpop.f32.mrb[0].mxu0
    %v2027 = vadd.f32 %v1708, %v2026
    %v2028 = vpop.f32.mrb[0].mxu0
    %v2029 = vadd.f32 %v1708, %v2028
    %2030 = vmatprep.mubr.bf16.mxu0 0
    %2031 = vmatmul.mubr.bf16.gmra.mrb[0].mxu0 %v1853
    %v2032 = vpop.f32.mrb[0].mxu0
    %v2033 = vadd.f32 %v1713, %v2032
    %v2034 = vpop.f32.mrb[0].mxu0
    %v2035 = vadd.f32 %v1713, %v2034
    %v2036 = vpop.f32.mrb[0].mxu0
    %v2037 = vadd.f32 %v1718, %v2036
    %v2038 = vpop.f32.mrb[0].mxu0
    %v2039 = vadd.f32 %v1718, %v2038
    %2040 = vmatprep.mubr.bf16.mxu0 0
    %2041 = vmatmul.mubr.bf16.gmra.mrb[0].mxu0 %v1856
    %v2042 = vpop.f32.mrb[0].mxu0
    %v2043 = vadd.f32 %v1723, %v2042
    %v2044 = vpop.f32.mrb[0].mxu0
    %v2045 = vadd.f32 %v1723, %v2044
    %v2046 = vpop.f32.mrb[0].mxu0
    %v2047 = vadd.f32 %v1728, %v2046
    %v2048 = vpop.f32.mrb[0].mxu0
    %v2049 = vadd.f32 %v1728, %v2048
    %2050 = vdwg.mxu0
    %v2051 = vmax.f32 %v1893, 0.0
    %v2052 = vmax.f32 %v1895, 0.0
    %v2053 = vmax.f32 %v1897, 0.0
    %v2054 = vmax.f32 %v1899, 0.0
    %v2055 = vmax.f32 %v1903, 0.0
    %v2056 = vmax.f32 %v1905, 0.0
    %v2057 = vmax.f32 %v1907, 0.0
    %v2058 = vmax.f32 %v1909, 0.0
    %v2059 = vmax.f32 %v1913, 0.0
    %v2060 = vmax.f32 %v1915, 0.0
    %v2061 = vmax.f32 %v1917, 0.0
    %v2062 = vmax.f32 %v1919, 0.0
    %v2063 = vmax.f32 %v1923, 0.0
    %v2064 = vmax.f32 %v1925, 0.0
    %v2065 = vmax.f32 %v1927, 0.0
    %v2066 = vmax.f32 %v1929, 0.0
    %v2067 = vmax.f32 %v1933, 0.0
    %v2068 = vmax.f32 %v1935, 0.0
    %v2069 = vmax.f32 %v1937, 0.0
    %v2070 = vmax.f32 %v1939, 0.0
    %v2071 = vmax.f32 %v1943, 0.0
    %v2072 = vmax.f32 %v1945, 0.0
    %v2073 = vmax.f32 %v1947, 0.0
    %v2074 = vmax.f32 %v1949, 0.0
    %v2075 = vmax.f32 %v1953, 0.0
    %v2076 = vmax.f32 %v1955, 0.0
    %v2077 = vmax.f32 %v1957, 0.0
    %v2078 = vmax.f32 %v1959, 0.0
    %v2079 = vmax.f32 %v1963, 0.0
    %v2080 = vmax.f32 %v1965, 0.0
    %v2081 = vmax.f32 %v1967, 0.0
    %v2082 = vmax.f32 %v1969, 0.0
    %v2083 = vmax.f32 %v1973, 0.0
    %v2084 = vmax.f32 %v1975, 0.0
    %v2085 = vmax.f32 %v1977, 0.0
    %v2086 = vmax.f32 %v1979, 0.0
    %v2087 = vmax.f32 %v1983, 0.0
    %v2088 = vmax.f32 %v1985, 0.0
    %v2089 = vmax.f32 %v1987, 0.0
    %v2090 = vmax.f32 %v1989, 0.0
    %v2091 = vmax.f32 %v1993, 0.0
    %v2092 = vmax.f32 %v1995, 0.0
    %v2093 = vmax.f32 %v1997, 0.0
    %v2094 = vmax.f32 %v1999, 0.0
    %v2095 = vmax.f32 %v2003, 0.0
    %v2096 = vmax.f32 %v2005, 0.0
    %v2097 = vmax.f32 %v2007, 0.0
    %v2098 = vmax.f32 %v2009, 0.0
    %v2099 = vmax.f32 %v2013, 0.0
    %v2100 = vmax.f32 %v2015, 0.0
    %v2101 = vmax.f32 %v2017, 0.0
    %v2102 = vmax.f32 %v2019, 0.0
    %v2103 = vmax.f32 %v2023, 0.0
    %v2104 = vmax.f32 %v2025, 0.0
    %v2105 = vmax.f32 %v2027, 0.0
    %v2106 = vmax.f32 %v2029, 0.0
    %v2107 = vmax.f32 %v2033, 0.0
    %v2108 = vmax.f32 %v2035, 0.0
    %v2109 = vmax.f32 %v2037, 0.0
    %v2110 = vmax.f32 %v2039, 0.0
    %v2111 = vmax.f32 %v2043, 0.0
    %v2112 = vmax.f32 %v2045, 0.0
    %v2113 = vmax.f32 %v2047, 0.0
    %v2114 = vmax.f32 %v2049, 0.0
    %v2115 = vld [vmem:[%s3 + $0x4] sm:$0x3]
    %v2117 = vlaneseq
    %v2118 = vshrl.u32 %v2117, 7
    %v2119 = vsub.s32 0, %v2118
    %v2120 = vrot.slane %v2115, %v2119
    %v2121 = vlaneseq
    %v2122 = vshrl.u32 %v2121, 7
    %v2123 = vsub.s32 1, %v2122
    %v2124 = vrot.slane %v2115, %v2123
    %2127 = vmatprep.subr.mxu0 %v2052
    %2128 = vmatpush1.msra.mxu0 %v2051
    %2129 = vmatprep.subr.mxu0 %v2054
    %2130 = vmatpush1.msra.mxu0 %v2053
    %2131 = vmatprep.subr.mxu0 %v2056
    %2132 = vmatpush1.msra.mxu0 %v2055
    %2133 = vmatprep.subr.mxu0 %v2058
    %2134 = vmatpush1.msra.mxu0 %v2057
    %2135 = vmatprep.subr.mxu0 %v2060
    %2136 = vmatpush1.msra.mxu0 %v2059
    %2137 = vmatprep.subr.mxu0 %v2062
    %2138 = vmatpush1.msra.mxu0 %v2061
    %2139 = vmatprep.subr.mxu0 %v2064
    %2140 = vmatpush1.msra.mxu0 %v2063
    %2141 = vmatprep.subr.mxu0 %v2066
    %2142 = vmatpush1.msra.mxu0 %v2065
    %2143 = vmatprep.subr.mxu0 %v2068
    %2144 = vmatpush1.msra.mxu0 %v2067
    %2145 = vmatprep.subr.mxu0 %v2070
    %2146 = vmatpush1.msra.mxu0 %v2069
    %2147 = vmatprep.subr.mxu0 %v2072
    %2148 = vmatpush1.msra.mxu0 %v2071
    %2149 = vmatprep.subr.mxu0 %v2074
    %2150 = vmatpush1.msra.mxu0 %v2073
    %2151 = vmatprep.subr.mxu0 %v2076
    %2152 = vmatpush1.msra.mxu0 %v2075
    %2153 = vmatprep.subr.mxu0 %v2078
    %2154 = vmatpush1.msra.mxu0 %v2077
    %2155 = vmatprep.subr.mxu0 %v2080
    %2156 = vmatpush1.msra.mxu0 %v2079
    %2157 = vmatprep.subr.mxu0 %v2082
    %2158 = vmatpush1.msra.mxu0 %v2081
    %2159 = vmatprep.subr.mxu0 %v2084
    %2160 = vmatpush1.msra.mxu0 %v2083
    %2161 = vmatprep.subr.mxu0 %v2086
    %2162 = vmatpush1.msra.mxu0 %v2085
    %2163 = vmatprep.subr.mxu0 %v2088
    %2164 = vmatpush1.msra.mxu0 %v2087
    %2165 = vmatprep.subr.mxu0 %v2090
    %2166 = vmatpush1.msra.mxu0 %v2089
    %2167 = vmatprep.subr.mxu0 %v2092
    %2168 = vmatpush1.msra.mxu0 %v2091
    %2169 = vmatprep.subr.mxu0 %v2094
    %2170 = vmatpush1.msra.mxu0 %v2093
    %2171 = vmatprep.subr.mxu0 %v2096
    %2172 = vmatpush1.msra.mxu0 %v2095
    %2173 = vmatprep.subr.mxu0 %v2098
    %2174 = vmatpush1.msra.mxu0 %v2097
    %2175 = vmatprep.subr.mxu0 %v2100
    %2176 = vmatpush1.msra.mxu0 %v2099
    %2177 = vmatprep.subr.mxu0 %v2102
    %2178 = vmatpush1.msra.mxu0 %v2101
    %2179 = vmatprep.subr.mxu0 %v2104
    %2180 = vmatpush1.msra.mxu0 %v2103
    %2181 = vmatprep.subr.mxu0 %v2106
    %2182 = vmatpush1.msra.mxu0 %v2105
    %2183 = vmatprep.subr.mxu0 %v2108
    %2184 = vmatpush1.msra.mxu0 %v2107
    %2185 = vmatprep.subr.mxu0 %v2110
    %2186 = vmatpush1.msra.mxu0 %v2109
    %2187 = vmatprep.subr.mxu0 %v2112
    %2188 = vmatpush1.msra.mxu0 %v2111
    %2189 = vmatprep.subr.mxu0 %v2114
    %2190 = vmatpush1.msra.mxu0 %v2113
    %2191 = vmatprep.mubr.f32.mxu0 %v2124
    %2192 = vmatmul.mubr.f32.gmra.mrb[0].mxu0 %v2120
    %v2193 = vpop.f32.mrb[0].mxu0
    %v2194 = vadd.f32 0.0, %v2193
    %v2195 = vpop.f32.mrb[0].mxu0
    %v2196 = vadd.f32 0.0, %v2195
    %2197 = vdwg.mxu0
    %v2198 = vadd.f32 %v1502, %v2194
    %v2199 = vadd.f32 %v1504, %v2196
    %v2200 = vld [vmem:[%s1 + $0x180] sm:$0xf]
    %v2201 = vld [vmem:[%s1 + $0x184] sm:$0xf]
    %v2202 = vld [vmem:[%s1 + $0x188] sm:$0xf]
    %v2203 = vld [vmem:[%s1 + $0x18c] sm:$0xf]
    %v2204 = vld [vmem:[%s1 + $0x190] sm:$0xf]
    %v2205 = vld [vmem:[%s1 + $0x194] sm:$0xf]
    %v2206 = vld [vmem:[%s1 + $0x198] sm:$0xf]
    %v2207 = vld [vmem:[%s1 + $0x19c] sm:$0xf]
    %v2208 = vld [vmem:[%s1 + $0x1a0] sm:$0xf]
    %v2209 = vld [vmem:[%s1 + $0x1a4] sm:$0xf]
    %v2210 = vld [vmem:[%s1 + $0x1a8] sm:$0xf]
    %v2211 = vld [vmem:[%s1 + $0x1ac] sm:$0xf]
    %v2212 = vld [vmem:[%s1 + $0x1b0] sm:$0xf]
    %v2213 = vld [vmem:[%s1 + $0x1b4] sm:$0xf]
    %v2214 = vld [vmem:[%s1 + $0x1b8] sm:$0xf]
    %v2215 = vld [vmem:[%s1 + $0x1bc] sm:$0xf]
    %v2216 = vld [vmem:[%s1 + $0x1c0] sm:$0xf]
    %v2217 = vld [vmem:[%s1 + $0x1c4] sm:$0xf]
    %v2218 = vld [vmem:[%s1 + $0x1c8] sm:$0xf]
    %v2219 = vld [vmem:[%s1 + $0x1cc] sm:$0xf]
    %v2220 = vld [vmem:[%s1 + $0x1d0] sm:$0xf]
    %v2221 = vld [vmem:[%s1 + $0x1d4] sm:$0xf]
    %v2222 = vld [vmem:[%s1 + $0x1d8] sm:$0xf]
    %v2223 = vld [vmem:[%s1 + $0x1dc] sm:$0xf]
    %v2224 = vld [vmem:[%s1 + $0x1e0] sm:$0xf]
    %v2225 = vld [vmem:[%s1 + $0x1e4] sm:$0xf]
    %v2226 = vld [vmem:[%s1 + $0x1e8] sm:$0xf]
    %v2227 = vld [vmem:[%s1 + $0x1ec] sm:$0xf]
    %v2228 = vld [vmem:[%s1 + $0x1f0] sm:$0xf]
    %v2229 = vld [vmem:[%s1 + $0x1f4] sm:$0xf]
    %v2230 = vld [vmem:[%s1 + $0x1f8] sm:$0xf]
    %v2231 = vld [vmem:[%s1 + $0x1fc] sm:$0xf]
    %v2232 = vld [vmem:[%s2 + $0x300] sm:$0xff]
    %v2233 = vld [vmem:[%s2 + $0x308] sm:$0xff]
    %v2234 = vld [vmem:[%s2 + $0x310] sm:$0xff]
    %v2235 = vld [vmem:[%s2 + $0x318] sm:$0xff]
    %v2236 = vld [vmem:[%s2 + $0x320] sm:$0xff]
    %v2237 = vld [vmem:[%s2 + $0x328] sm:$0xff]
    %v2238 = vld [vmem:[%s2 + $0x330] sm:$0xff]
    %v2239 = vld [vmem:[%s2 + $0x338] sm:$0xff]
    %v2240 = vld [vmem:[%s2 + $0x340] sm:$0xff]
    %v2241 = vld [vmem:[%s2 + $0x348] sm:$0xff]
    %v2242 = vld [vmem:[%s2 + $0x350] sm:$0xff]
    %v2243 = vld [vmem:[%s2 + $0x358] sm:$0xff]
    %v2244 = vld [vmem:[%s2 + $0x360] sm:$0xff]
    %v2245 = vld [vmem:[%s2 + $0x368] sm:$0xff]
    %v2246 = vld [vmem:[%s2 + $0x370] sm:$0xff]
    %v2247 = vld [vmem:[%s2 + $0x378] sm:$0xff]
    %v2248 = vld [vmem:[%s2 + $0x380] sm:$0xff]
    %v2249 = vld [vmem:[%s2 + $0x388] sm:$0xff]
    %v2250 = vld [vmem:[%s2 + $0x390] sm:$0xff]
    %v2251 = vld [vmem:[%s2 + $0x398] sm:$0xff]
    %v2252 = vld [vmem:[%s2 + $0x3a0] sm:$0xff]
    %v2253 = vld [vmem:[%s2 + $0x3a8] sm:$0xff]
    %v2254 = vld [vmem:[%s2 + $0x3b0] sm:$0xff]
    %v2255 = vld [vmem:[%s2 + $0x3b8] sm:$0xff]
    %v2256 = vld [vmem:[%s2 + $0x3c0] sm:$0xff]
    %v2257 = vld [vmem:[%s2 + $0x3c8] sm:$0xff]
    %v2258 = vld [vmem:[%s2 + $0x3d0] sm:$0xff]
    %v2259 = vld [vmem:[%s2 + $0x3d8] sm:$0xff]
    %v2260 = vld [vmem:[%s2 + $0x3e0] sm:$0xff]
    %v2261 = vld [vmem:[%s2 + $0x3e8] sm:$0xff]
    %v2262 = vld [vmem:[%s2 + $0x3f0] sm:$0xff]
    %v2263 = vld [vmem:[%s2 + $0x3f8] sm:$0xff]
    %2265 = vset.pattern.permute.xlu0 0
    %2266 = vperm.xlu0 %2265, %v2232
    %v2267 = vpop.permute.xlu0 %2266
    %2270 = vset.pattern.permute.xlu0 0
    %2271 = vperm.xlu0 %2270, %v2233
    %v2272 = vpop.permute.xlu0 %2271
    %2275 = vset.pattern.permute.xlu0 0
    %2276 = vperm.xlu0 %2275, %v2234
    %v2277 = vpop.permute.xlu0 %2276
    %2280 = vset.pattern.permute.xlu0 0
    %2281 = vperm.xlu0 %2280, %v2235
    %v2282 = vpop.permute.xlu0 %2281
    %2285 = vset.pattern.permute.xlu0 0
    %2286 = vperm.xlu0 %2285, %v2236
    %v2287 = vpop.permute.xlu0 %2286
    %2290 = vset.pattern.permute.xlu0 0
    %2291 = vperm.xlu0 %2290, %v2237
    %v2292 = vpop.permute.xlu0 %2291
    %2295 = vset.pattern.permute.xlu0 0
    %2296 = vperm.xlu0 %2295, %v2238
    %v2297 = vpop.permute.xlu0 %2296
    %2300 = vset.pattern.permute.xlu0 0
    %2301 = vperm.xlu0 %2300, %v2239
    %v2302 = vpop.permute.xlu0 %2301
    %2305 = vset.pattern.permute.xlu0 0
    %2306 = vperm.xlu0 %2305, %v2240
    %v2307 = vpop.permute.xlu0 %2306
    %2310 = vset.pattern.permute.xlu0 0
    %2311 = vperm.xlu0 %2310, %v2241
    %v2312 = vpop.permute.xlu0 %2311
    %2315 = vset.pattern.permute.xlu0 0
    %2316 = vperm.xlu0 %2315, %v2242
    %v2317 = vpop.permute.xlu0 %2316
    %2320 = vset.pattern.permute.xlu0 0
    %2321 = vperm.xlu0 %2320, %v2243
    %v2322 = vpop.permute.xlu0 %2321
    %2325 = vset.pattern.permute.xlu0 0
    %2326 = vperm.xlu0 %2325, %v2244
    %v2327 = vpop.permute.xlu0 %2326
    %2330 = vset.pattern.permute.xlu0 0
    %2331 = vperm.xlu0 %2330, %v2245
    %v2332 = vpop.permute.xlu0 %2331
    %2335 = vset.pattern.permute.xlu0 0
    %2336 = vperm.xlu0 %2335, %v2246
    %v2337 = vpop.permute.xlu0 %2336
    %2340 = vset.pattern.permute.xlu0 0
    %2341 = vperm.xlu0 %2340, %v2247
    %v2342 = vpop.permute.xlu0 %2341
    %2345 = vset.pattern.permute.xlu0 0
    %2346 = vperm.xlu0 %2345, %v2248
    %v2347 = vpop.permute.xlu0 %2346
    %2350 = vset.pattern.permute.xlu0 0
    %2351 = vperm.xlu0 %2350, %v2249
    %v2352 = vpop.permute.xlu0 %2351
    %2355 = vset.pattern.permute.xlu0 0
    %2356 = vperm.xlu0 %2355, %v2250
    %v2357 = vpop.permute.xlu0 %2356
    %2360 = vset.pattern.permute.xlu0 0
    %2361 = vperm.xlu0 %2360, %v2251
    %v2362 = vpop.permute.xlu0 %2361
    %2365 = vset.pattern.permute.xlu0 0
    %2366 = vperm.xlu0 %2365, %v2252
    %v2367 = vpop.permute.xlu0 %2366
    %2370 = vset.pattern.permute.xlu0 0
    %2371 = vperm.xlu0 %2370, %v2253
    %v2372 = vpop.permute.xlu0 %2371
    %2375 = vset.pattern.permute.xlu0 0
    %2376 = vperm.xlu0 %2375, %v2254
    %v2377 = vpop.permute.xlu0 %2376
    %2380 = vset.pattern.permute.xlu0 0
    %2381 = vperm.xlu0 %2380, %v2255
    %v2382 = vpop.permute.xlu0 %2381
    %2385 = vset.pattern.permute.xlu0 0
    %2386 = vperm.xlu0 %2385, %v2256
    %v2387 = vpop.permute.xlu0 %2386
    %2390 = vset.pattern.permute.xlu0 0
    %2391 = vperm.xlu0 %2390, %v2257
    %v2392 = vpop.permute.xlu0 %2391
    %2395 = vset.pattern.permute.xlu0 0
    %2396 = vperm.xlu0 %2395, %v2258
    %v2397 = vpop.permute.xlu0 %2396
    %2400 = vset.pattern.permute.xlu0 0
    %2401 = vperm.xlu0 %2400, %v2259
    %v2402 = vpop.permute.xlu0 %2401
    %2405 = vset.pattern.permute.xlu0 0
    %2406 = vperm.xlu0 %2405, %v2260
    %v2407 = vpop.permute.xlu0 %2406
    %2410 = vset.pattern.permute.xlu0 0
    %2411 = vperm.xlu0 %2410, %v2261
    %v2412 = vpop.permute.xlu0 %2411
    %2415 = vset.pattern.permute.xlu0 0
    %2416 = vperm.xlu0 %2415, %v2262
    %v2417 = vpop.permute.xlu0 %2416
    %2420 = vset.pattern.permute.xlu0 0
    %2421 = vperm.xlu0 %2420, %v2263
    %v2422 = vpop.permute.xlu0 %2421
    %v2456 = vunpack.c.l.b16 %v2200
    %v2457 = vunpack.c.l.b16 %v2201
    %v2458 = vunpack.c.l.b16 %v2202
    %v2459 = vunpack.c.l.b16 %v2203
    %v2460 = vunpack.c.l.b16 %v2204
    %v2461 = vunpack.c.l.b16 %v2205
    %v2462 = vunpack.c.l.b16 %v2206
    %v2463 = vunpack.c.l.b16 %v2207
    %v2464 = vunpack.c.l.b16 %v2208
    %v2465 = vunpack.c.l.b16 %v2209
    %v2466 = vunpack.c.l.b16 %v2210
    %v2467 = vunpack.c.l.b16 %v2211
    %v2468 = vunpack.c.l.b16 %v2212
    %v2469 = vunpack.c.l.b16 %v2213
    %v2470 = vunpack.c.l.b16 %v2214
    %v2471 = vunpack.c.l.b16 %v2215
    %v2472 = vunpack.c.l.b16 %v2216
    %v2473 = vunpack.c.l.b16 %v2217
    %v2474 = vunpack.c.l.b16 %v2218
    %v2475 = vunpack.c.l.b16 %v2219
    %v2476 = vunpack.c.l.b16 %v2220
    %v2477 = vunpack.c.l.b16 %v2221
    %v2478 = vunpack.c.l.b16 %v2222
    %v2479 = vunpack.c.l.b16 %v2223
    %v2480 = vunpack.c.l.b16 %v2224
    %v2481 = vunpack.c.l.b16 %v2225
    %v2482 = vunpack.c.l.b16 %v2226
    %v2483 = vunpack.c.l.b16 %v2227
    %v2484 = vunpack.c.l.b16 %v2228
    %v2485 = vunpack.c.l.b16 %v2229
    %v2486 = vunpack.c.l.b16 %v2230
    %v2487 = vunpack.c.l.b16 %v2231
    %v2488 = vpack.c.b16 %v2457, %v2456
    %v2489 = vpack.c.b16 %v2459, %v2458
    %v2490 = vpack.c.b16 %v2461, %v2460
    %v2491 = vpack.c.b16 %v2463, %v2462
    %v2492 = vpack.c.b16 %v2465, %v2464
    %v2493 = vpack.c.b16 %v2467, %v2466
    %v2494 = vpack.c.b16 %v2469, %v2468
    %v2495 = vpack.c.b16 %v2471, %v2470
    %v2496 = vpack.c.b16 %v2473, %v2472
    %v2497 = vpack.c.b16 %v2475, %v2474
    %v2498 = vpack.c.b16 %v2477, %v2476
    %v2499 = vpack.c.b16 %v2479, %v2478
    %v2500 = vpack.c.b16 %v2481, %v2480
    %v2501 = vpack.c.b16 %v2483, %v2482
    %v2502 = vpack.c.b16 %v2485, %v2484
    %v2503 = vpack.c.b16 %v2487, %v2486
    %v2505 = vsel %vm425, %v2488, 0
    %v2508 = vsel %vm425, %v2489, 0
    %v2511 = vsel %vm425, %v2490, 0
    %v2514 = vsel %vm425, %v2491, 0
    %v2517 = vsel %vm425, %v2492, 0
    %v2520 = vsel %vm425, %v2493, 0
    %v2523 = vsel %vm425, %v2494, 0
    %v2526 = vsel %vm425, %v2495, 0
    %v2529 = vsel %vm425, %v2496, 0
    %v2532 = vsel %vm425, %v2497, 0
    %v2535 = vsel %vm425, %v2498, 0
    %v2538 = vsel %vm425, %v2499, 0
    %v2541 = vsel %vm425, %v2500, 0
    %v2544 = vsel %vm425, %v2501, 0
    %v2547 = vsel %vm425, %v2502, 0
    %v2550 = vsel %vm425, %v2503, 0
    %2552 = vmatprep.subr.bf16.mxu0 %v120
    %2553 = vmatpush1.bf16.msra.mxu0 %v119
    %2554 = vmatprep.subr.bf16.mxu0 0
    %2555 = vmatpush1.bf16.msra.mxu0 0
    %2556 = vmatprep.subr.bf16.mxu0 0
    %2557 = vmatpush1.bf16.msra.mxu0 0
    %2558 = vmatprep.subr.bf16.mxu0 0
    %2559 = vmatpush1.bf16.msra.mxu0 0
    %2560 = vmatprep.subr.bf16.mxu0 0
    %2561 = vmatpush1.bf16.msra.mxu0 0
    %2562 = vmatprep.subr.bf16.mxu0 0
    %2563 = vmatpush1.bf16.msra.mxu0 0
    %2564 = vmatprep.subr.bf16.mxu0 0
    %2565 = vmatpush1.bf16.msra.mxu0 0
    %2566 = vmatprep.subr.bf16.mxu0 0
    %2567 = vmatpush1.bf16.msra.mxu0 0
    %2568 = vmatprep.subr.bf16.mxu0 0
    %2569 = vmatpush1.bf16.msra.mxu0 0
    %2570 = vmatprep.subr.bf16.mxu0 0
    %2571 = vmatpush1.bf16.msra.mxu0 0
    %2572 = vmatprep.subr.bf16.mxu0 0
    %2573 = vmatpush1.bf16.msra.mxu0 0
    %2574 = vmatprep.subr.bf16.mxu0 0
    %2575 = vmatpush1.bf16.msra.mxu0 0
    %2576 = vmatprep.subr.bf16.mxu0 0
    %2577 = vmatpush1.bf16.msra.mxu0 0
    %2578 = vmatprep.subr.bf16.mxu0 0
    %2579 = vmatpush1.bf16.msra.mxu0 0
    %2580 = vmatprep.subr.bf16.mxu0 0
    %2581 = vmatpush1.bf16.msra.mxu0 0
    %2582 = vmatprep.subr.bf16.mxu0 0
    %2583 = vmatpush1.bf16.msra.mxu0 0
    %2584 = vmatprep.mubr.bf16.mxu0 0
    %2585 = vmatmul.mubr.bf16.gmra.mrb[0].mxu0 %v2505
    %v2586 = vpop.f32.mrb[0].mxu0
    %v2587 = vadd.f32 %v2267, %v2586
    %v2588 = vpop.f32.mrb[0].mxu0
    %v2589 = vadd.f32 %v2267, %v2588
    %v2590 = vpop.f32.mrb[0].mxu0
    %v2591 = vadd.f32 %v2272, %v2590
    %v2592 = vpop.f32.mrb[0].mxu0
    %v2593 = vadd.f32 %v2272, %v2592
    %2594 = vmatprep.mubr.bf16.mxu0 0
    %2595 = vmatmul.mubr.bf16.gmra.mrb[0].mxu0 %v2508
    %v2596 = vpop.f32.mrb[0].mxu0
    %v2597 = vadd.f32 %v2277, %v2596
    %v2598 = vpop.f32.mrb[0].mxu0
    %v2599 = vadd.f32 %v2277, %v2598
    %v2600 = vpop.f32.mrb[0].mxu0
    %v2601 = vadd.f32 %v2282, %v2600
    %v2602 = vpop.f32.mrb[0].mxu0
    %v2603 = vadd.f32 %v2282, %v2602
    %2604 = vmatprep.mubr.bf16.mxu0 0
    %2605 = vmatmul.mubr.bf16.gmra.mrb[0].mxu0 %v2511
    %v2606 = vpop.f32.mrb[0].mxu0
    %v2607 = vadd.f32 %v2287, %v2606
    %v2608 = vpop.f32.mrb[0].mxu0
    %v2609 = vadd.f32 %v2287, %v2608
    %v2610 = vpop.f32.mrb[0].mxu0
    %v2611 = vadd.f32 %v2292, %v2610
    %v2612 = vpop.f32.mrb[0].mxu0
    %v2613 = vadd.f32 %v2292, %v2612
    %2614 = vmatprep.mubr.bf16.mxu0 0
    %2615 = vmatmul.mubr.bf16.gmra.mrb[0].mxu0 %v2514
    %v2616 = vpop.f32.mrb[0].mxu0
    %v2617 = vadd.f32 %v2297, %v2616
    %v2618 = vpop.f32.mrb[0].mxu0
    %v2619 = vadd.f32 %v2297, %v2618
    %v2620 = vpop.f32.mrb[0].mxu0
    %v2621 = vadd.f32 %v2302, %v2620
    %v2622 = vpop.f32.mrb[0].mxu0
    %v2623 = vadd.f32 %v2302, %v2622
    %2624 = vmatprep.mubr.bf16.mxu0 0
    %2625 = vmatmul.mubr.bf16.gmra.mrb[0].mxu0 %v2517
    %v2626 = vpop.f32.mrb[0].mxu0
    %v2627 = vadd.f32 %v2307, %v2626
    %v2628 = vpop.f32.mrb[0].mxu0
    %v2629 = vadd.f32 %v2307, %v2628
    %v2630 = vpop.f32.mrb[0].mxu0
    %v2631 = vadd.f32 %v2312, %v2630
    %v2632 = vpop.f32.mrb[0].mxu0
    %v2633 = vadd.f32 %v2312, %v2632
    %2634 = vmatprep.mubr.bf16.mxu0 0
    %2635 = vmatmul.mubr.bf16.gmra.mrb[0].mxu0 %v2520
    %v2636 = vpop.f32.mrb[0].mxu0
    %v2637 = vadd.f32 %v2317, %v2636
    %v2638 = vpop.f32.mrb[0].mxu0
    %v2639 = vadd.f32 %v2317, %v2638
    %v2640 = vpop.f32.mrb[0].mxu0
    %v2641 = vadd.f32 %v2322, %v2640
    %v2642 = vpop.f32.mrb[0].mxu0
    %v2643 = vadd.f32 %v2322, %v2642
    %2644 = vmatprep.mubr.bf16.mxu0 0
    %2645 = vmatmul.mubr.bf16.gmra.mrb[0].mxu0 %v2523
    %v2646 = vpop.f32.mrb[0].mxu0
    %v2647 = vadd.f32 %v2327, %v2646
    %v2648 = vpop.f32.mrb[0].mxu0
    %v2649 = vadd.f32 %v2327, %v2648
    %v2650 = vpop.f32.mrb[0].mxu0
    %v2651 = vadd.f32 %v2332, %v2650
    %v2652 = vpop.f32.mrb[0].mxu0
    %v2653 = vadd.f32 %v2332, %v2652
    %2654 = vmatprep.mubr.bf16.mxu0 0
    %2655 = vmatmul.mubr.bf16.gmra.mrb[0].mxu0 %v2526
    %v2656 = vpop.f32.mrb[0].mxu0
    %v2657 = vadd.f32 %v2337, %v2656
    %v2658 = vpop.f32.mrb[0].mxu0
    %v2659 = vadd.f32 %v2337, %v2658
    %v2660 = vpop.f32.mrb[0].mxu0
    %v2661 = vadd.f32 %v2342, %v2660
    %v2662 = vpop.f32.mrb[0].mxu0
    %v2663 = vadd.f32 %v2342, %v2662
    %2664 = vmatprep.mubr.bf16.mxu0 0
    %2665 = vmatmul.mubr.bf16.gmra.mrb[0].mxu0 %v2529
    %v2666 = vpop.f32.mrb[0].mxu0
    %v2667 = vadd.f32 %v2347, %v2666
    %v2668 = vpop.f32.mrb[0].mxu0
    %v2669 = vadd.f32 %v2347, %v2668
    %v2670 = vpop.f32.mrb[0].mxu0
    %v2671 = vadd.f32 %v2352, %v2670
    %v2672 = vpop.f32.mrb[0].mxu0
    %v2673 = vadd.f32 %v2352, %v2672
    %2674 = vmatprep.mubr.bf16.mxu0 0
    %2675 = vmatmul.mubr.bf16.gmra.mrb[0].mxu0 %v2532
    %v2676 = vpop.f32.mrb[0].mxu0
    %v2677 = vadd.f32 %v2357, %v2676
    %v2678 = vpop.f32.mrb[0].mxu0
    %v2679 = vadd.f32 %v2357, %v2678
    %v2680 = vpop.f32.mrb[0].mxu0
    %v2681 = vadd.f32 %v2362, %v2680
    %v2682 = vpop.f32.mrb[0].mxu0
    %v2683 = vadd.f32 %v2362, %v2682
    %2684 = vmatprep.mubr.bf16.mxu0 0
    %2685 = vmatmul.mubr.bf16.gmra.mrb[0].mxu0 %v2535
    %v2686 = vpop.f32.mrb[0].mxu0
    %v2687 = vadd.f32 %v2367, %v2686
    %v2688 = vpop.f32.mrb[0].mxu0
    %v2689 = vadd.f32 %v2367, %v2688
    %v2690 = vpop.f32.mrb[0].mxu0
    %v2691 = vadd.f32 %v2372, %v2690
    %v2692 = vpop.f32.mrb[0].mxu0
    %v2693 = vadd.f32 %v2372, %v2692
    %2694 = vmatprep.mubr.bf16.mxu0 0
    %2695 = vmatmul.mubr.bf16.gmra.mrb[0].mxu0 %v2538
    %v2696 = vpop.f32.mrb[0].mxu0
    %v2697 = vadd.f32 %v2377, %v2696
    %v2698 = vpop.f32.mrb[0].mxu0
    %v2699 = vadd.f32 %v2377, %v2698
    %v2700 = vpop.f32.mrb[0].mxu0
    %v2701 = vadd.f32 %v2382, %v2700
    %v2702 = vpop.f32.mrb[0].mxu0
    %v2703 = vadd.f32 %v2382, %v2702
    %2704 = vmatprep.mubr.bf16.mxu0 0
    %2705 = vmatmul.mubr.bf16.gmra.mrb[0].mxu0 %v2541
    %v2706 = vpop.f32.mrb[0].mxu0
    %v2707 = vadd.f32 %v2387, %v2706
    %v2708 = vpop.f32.mrb[0].mxu0
    %v2709 = vadd.f32 %v2387, %v2708
    %v2710 = vpop.f32.mrb[0].mxu0
    %v2711 = vadd.f32 %v2392, %v2710
    %v2712 = vpop.f32.mrb[0].mxu0
    %v2713 = vadd.f32 %v2392, %v2712
    %2714 = vmatprep.mubr.bf16.mxu0 0
    %2715 = vmatmul.mubr.bf16.gmra.mrb[0].mxu0 %v2544
    %v2716 = vpop.f32.mrb[0].mxu0
    %v2717 = vadd.f32 %v2397, %v2716
    %v2718 = vpop.f32.mrb[0].mxu0
    %v2719 = vadd.f32 %v2397, %v2718
    %v2720 = vpop.f32.mrb[0].mxu0
    %v2721 = vadd.f32 %v2402, %v2720
    %v2722 = vpop.f32.mrb[0].mxu0
    %v2723 = vadd.f32 %v2402, %v2722
    %2724 = vmatprep.mubr.bf16.mxu0 0
    %2725 = vmatmul.mubr.bf16.gmra.mrb[0].mxu0 %v2547
    %v2726 = vpop.f32.mrb[0].mxu0
    %v2727 = vadd.f32 %v2407, %v2726
    %v2728 = vpop.f32.mrb[0].mxu0
    %v2729 = vadd.f32 %v2407, %v2728
    %v2730 = vpop.f32.mrb[0].mxu0
    %v2731 = vadd.f32 %v2412, %v2730
    %v2732 = vpop.f32.mrb[0].mxu0
    %v2733 = vadd.f32 %v2412, %v2732
    %2734 = vmatprep.mubr.bf16.mxu0 0
    %2735 = vmatmul.mubr.bf16.gmra.mrb[0].mxu0 %v2550
    %v2736 = vpop.f32.mrb[0].mxu0
    %v2737 = vadd.f32 %v2417, %v2736
    %v2738 = vpop.f32.mrb[0].mxu0
    %v2739 = vadd.f32 %v2417, %v2738
    %v2740 = vpop.f32.mrb[0].mxu0
    %v2741 = vadd.f32 %v2422, %v2740
    %v2742 = vpop.f32.mrb[0].mxu0
    %v2743 = vadd.f32 %v2422, %v2742
    %2744 = vdwg.mxu0
    %v2745 = vmax.f32 %v2587, 0.0
    %v2746 = vmax.f32 %v2589, 0.0
    %v2747 = vmax.f32 %v2591, 0.0
    %v2748 = vmax.f32 %v2593, 0.0
    %v2749 = vmax.f32 %v2597, 0.0
    %v2750 = vmax.f32 %v2599, 0.0
    %v2751 = vmax.f32 %v2601, 0.0
    %v2752 = vmax.f32 %v2603, 0.0
    %v2753 = vmax.f32 %v2607, 0.0
    %v2754 = vmax.f32 %v2609, 0.0
    %v2755 = vmax.f32 %v2611, 0.0
    %v2756 = vmax.f32 %v2613, 0.0
    %v2757 = vmax.f32 %v2617, 0.0
    %v2758 = vmax.f32 %v2619, 0.0
    %v2759 = vmax.f32 %v2621, 0.0
    %v2760 = vmax.f32 %v2623, 0.0
    %v2761 = vmax.f32 %v2627, 0.0
    %v2762 = vmax.f32 %v2629, 0.0
    %v2763 = vmax.f32 %v2631, 0.0
    %v2764 = vmax.f32 %v2633, 0.0
    %v2765 = vmax.f32 %v2637, 0.0
    %v2766 = vmax.f32 %v2639, 0.0
    %v2767 = vmax.f32 %v2641, 0.0
    %v2768 = vmax.f32 %v2643, 0.0
    %v2769 = vmax.f32 %v2647, 0.0
    %v2770 = vmax.f32 %v2649, 0.0
    %v2771 = vmax.f32 %v2651, 0.0
    %v2772 = vmax.f32 %v2653, 0.0
    %v2773 = vmax.f32 %v2657, 0.0
    %v2774 = vmax.f32 %v2659, 0.0
    %v2775 = vmax.f32 %v2661, 0.0
    %v2776 = vmax.f32 %v2663, 0.0
    %v2777 = vmax.f32 %v2667, 0.0
    %v2778 = vmax.f32 %v2669, 0.0
    %v2779 = vmax.f32 %v2671, 0.0
    %v2780 = vmax.f32 %v2673, 0.0
    %v2781 = vmax.f32 %v2677, 0.0
    %v2782 = vmax.f32 %v2679, 0.0
    %v2783 = vmax.f32 %v2681, 0.0
    %v2784 = vmax.f32 %v2683, 0.0
    %v2785 = vmax.f32 %v2687, 0.0
    %v2786 = vmax.f32 %v2689, 0.0
    %v2787 = vmax.f32 %v2691, 0.0
    %v2788 = vmax.f32 %v2693, 0.0
    %v2789 = vmax.f32 %v2697, 0.0
    %v2790 = vmax.f32 %v2699, 0.0
    %v2791 = vmax.f32 %v2701, 0.0
    %v2792 = vmax.f32 %v2703, 0.0
    %v2793 = vmax.f32 %v2707, 0.0
    %v2794 = vmax.f32 %v2709, 0.0
    %v2795 = vmax.f32 %v2711, 0.0
    %v2796 = vmax.f32 %v2713, 0.0
    %v2797 = vmax.f32 %v2717, 0.0
    %v2798 = vmax.f32 %v2719, 0.0
    %v2799 = vmax.f32 %v2721, 0.0
    %v2800 = vmax.f32 %v2723, 0.0
    %v2801 = vmax.f32 %v2727, 0.0
    %v2802 = vmax.f32 %v2729, 0.0
    %v2803 = vmax.f32 %v2731, 0.0
    %v2804 = vmax.f32 %v2733, 0.0
    %v2805 = vmax.f32 %v2737, 0.0
    %v2806 = vmax.f32 %v2739, 0.0
    %v2807 = vmax.f32 %v2741, 0.0
    %v2808 = vmax.f32 %v2743, 0.0
    %v2809 = vld [vmem:[%s3 + $0x6] sm:$0x3]
    %v2811 = vlaneseq
    %v2812 = vshrl.u32 %v2811, 7
    %v2813 = vsub.s32 0, %v2812
    %v2814 = vrot.slane %v2809, %v2813
    %v2815 = vlaneseq
    %v2816 = vshrl.u32 %v2815, 7
    %v2817 = vsub.s32 1, %v2816
    %v2818 = vrot.slane %v2809, %v2817
    %2821 = vmatprep.subr.mxu0 %v2746
    %2822 = vmatpush1.msra.mxu0 %v2745
    %2823 = vmatprep.subr.mxu0 %v2748
    %2824 = vmatpush1.msra.mxu0 %v2747
    %2825 = vmatprep.subr.mxu0 %v2750
    %2826 = vmatpush1.msra.mxu0 %v2749
    %2827 = vmatprep.subr.mxu0 %v2752
    %2828 = vmatpush1.msra.mxu0 %v2751
    %2829 = vmatprep.subr.mxu0 %v2754
    %2830 = vmatpush1.msra.mxu0 %v2753
    %2831 = vmatprep.subr.mxu0 %v2756
    %2832 = vmatpush1.msra.mxu0 %v2755
    %2833 = vmatprep.subr.mxu0 %v2758
    %2834 = vmatpush1.msra.mxu0 %v2757
    %2835 = vmatprep.subr.mxu0 %v2760
    %2836 = vmatpush1.msra.mxu0 %v2759
    %2837 = vmatprep.subr.mxu0 %v2762
    %2838 = vmatpush1.msra.mxu0 %v2761
    %2839 = vmatprep.subr.mxu0 %v2764
    %2840 = vmatpush1.msra.mxu0 %v2763
    %2841 = vmatprep.subr.mxu0 %v2766
    %2842 = vmatpush1.msra.mxu0 %v2765
    %2843 = vmatprep.subr.mxu0 %v2768
    %2844 = vmatpush1.msra.mxu0 %v2767
    %2845 = vmatprep.subr.mxu0 %v2770
    %2846 = vmatpush1.msra.mxu0 %v2769
    %2847 = vmatprep.subr.mxu0 %v2772
    %2848 = vmatpush1.msra.mxu0 %v2771
    %2849 = vmatprep.subr.mxu0 %v2774
    %2850 = vmatpush1.msra.mxu0 %v2773
    %2851 = vmatprep.subr.mxu0 %v2776
    %2852 = vmatpush1.msra.mxu0 %v2775
    %2853 = vmatprep.subr.mxu0 %v2778
    %2854 = vmatpush1.msra.mxu0 %v2777
    %2855 = vmatprep.subr.mxu0 %v2780
    %2856 = vmatpush1.msra.mxu0 %v2779
    %2857 = vmatprep.subr.mxu0 %v2782
    %2858 = vmatpush1.msra.mxu0 %v2781
    %2859 = vmatprep.subr.mxu0 %v2784
    %2860 = vmatpush1.msra.mxu0 %v2783
    %2861 = vmatprep.subr.mxu0 %v2786
    %2862 = vmatpush1.msra.mxu0 %v2785
    %2863 = vmatprep.subr.mxu0 %v2788
    %2864 = vmatpush1.msra.mxu0 %v2787
    %2865 = vmatprep.subr.mxu0 %v2790
    %2866 = vmatpush1.msra.mxu0 %v2789
    %2867 = vmatprep.subr.mxu0 %v2792
    %2868 = vmatpush1.msra.mxu0 %v2791
    %2869 = vmatprep.subr.mxu0 %v2794
    %2870 = vmatpush1.msra.mxu0 %v2793
    %2871 = vmatprep.subr.mxu0 %v2796
    %2872 = vmatpush1.msra.mxu0 %v2795
    %2873 = vmatprep.subr.mxu0 %v2798
    %2874 = vmatpush1.msra.mxu0 %v2797
    %2875 = vmatprep.subr.mxu0 %v2800
    %2876 = vmatpush1.msra.mxu0 %v2799
    %2877 = vmatprep.subr.mxu0 %v2802
    %2878 = vmatpush1.msra.mxu0 %v2801
    %2879 = vmatprep.subr.mxu0 %v2804
    %2880 = vmatpush1.msra.mxu0 %v2803
    %2881 = vmatprep.subr.mxu0 %v2806
    %2882 = vmatpush1.msra.mxu0 %v2805
    %2883 = vmatprep.subr.mxu0 %v2808
    %2884 = vmatpush1.msra.mxu0 %v2807
    %2885 = vmatprep.mubr.f32.mxu0 %v2818
    %2886 = vmatmul.mubr.f32.gmra.mrb[0].mxu0 %v2814
    %v2887 = vpop.f32.mrb[0].mxu0
    %v2888 = vadd.f32 0.0, %v2887
    %v2889 = vpop.f32.mrb[0].mxu0
    %v2890 = vadd.f32 0.0, %v2889
    %2891 = vdwg.mxu0
    %v2892 = vadd.f32 %v2198, %v2888
    %v2893 = vadd.f32 %v2199, %v2890
    %s2894 = sld [smem:[#allocation2]]
    %v2895 = vstv %s2894
    %v2896 = vadd.f32 %v2892, %v2895
    %v2897 = vadd.f32 %v2893, %v2895
    %v2900 = vcombine.low %v2896, %v2897
    %v2902 = vunpack.c.l.s4 1966171168
    %v2903 = vunpack.c.0.s8 %v2902
    %v2904 = vlaneseq
    %v2905 = vshrl.u32 %v2904, 7
    %v2906 = vsub.s32 %v2903, %v2905
    %v2907 = vrot.slane %v2900, %v2906
    %v2909 = vunpack.c.l.s4 1966171168
    %v2910 = vunpack.c.0.s8 %v2909
    %v2911 = vlaneseq
    %v2912 = vshrl.u32 %v2911, 7
    %v2913 = vsub.s32 %v2910, %v2912
    %v2914 = vrot.slane %v2907, %v2913
    %v2916 = vlaneseq
    %vm2917 = vcmp.ge.s32.totalorder %v2916, 0
    %vm2918 = vcmp.lt.s32.totalorder %v2916, 256
    %vm2919 = vmand %vm2917, %vm2918
    %2920 = vst.msk [vmem:[#allocation3] sm:$0x3] %vm2919, %v2914
    // Predicated region
    $region22: #{tpu_custom_call.1} parent=1 // pred_check
      _
    $region23: #{tpu_custom_call.1} parent=1 // pred_check_branch
      %2922 = sbr.rel (0) target = $region25
    $region24: #{tpu_custom_call.1} parent=1 // pred_region
      %s2924 = ssub.s32 32, 32
      %2925 = vsyncadd [#allocation4], %s2924
      %s2927 = sshll.u32 [#allocation3], 4
      %s2928 = int_to_ptr.vmem [resolvable:$true] %s2927
      %2930 = dma.vmem_to_hbm [thread:$0]  %s2928, 32, %s5, [#allocation4]
    $region25: #{tpu_custom_call.1} parent=1 // pred_fallthru
      _
    // Predicated region
    $region26: #{tpu_custom_call.1} parent=1 // pred_check
      _
    $region27: #{tpu_custom_call.1} parent=1 // pred_check_branch
      %2932 = sbr.rel (0) target = $region29
    $region28: #{tpu_custom_call.1} parent=1 // pred_region
      %2933 = dma.done [#allocation4], 32
    $region29: #{tpu_custom_call.1} parent=1 // pred_fallthru
      _
    %2934 = vsyncpa [#allocation4], 1

</llo_original>
